<compile_context>
chip_gen: v7x
topology: tpu7x:2x2x1
jax: 0.10.0
libtpu: 0.0.40
codegen_flags: <defaults>
</compile_context>

<pallas_src>
import jax
import jax.numpy as jnp
from jax import lax
from jax.experimental import pallas as pl
from jax.experimental.pallas import tpu as pltpu


# MXU input dtype.  float32 keeps bit-exactness against the f32 reference.
# On v6e/v7x set to jnp.bfloat16 (G is then stored in bf16, halving its
# HBM/VMEM traffic and running the MXU at full bf16 rate); accumulation stays
# f32 via preferred_element_type.  TSM / bias math stays f32 on the VPU
# (v5e-friendly).
MXU_INPUT_DTYPE = jnp.float32


def build_fold_matrix(w_oihw, *, scale, stride, padding, H, W):
    """Fold nearest-upsample(scale) + zero-pad(padding) + conv(stride) into one
    dense matrix G: (C*H*W, Cout*Hout*Wout), column index = co*Ho*Wo + oy*Wo + ox.
    Row index matches a (C, H, W) flattening of the *original* (pre-upsample)
    frame."""
    Cout, C, KH, KW = w_oihw.shape
    Hs, Ws = H * scale, W * scale
    Hout = (Hs + 2 * padding - KH) // stride + 1
    Wout = (Ws + 2 * padding - KW) // stride + 1

    def sel(K_, S_in, S_out):
        # sel[k, src, out] = 1 iff padded-upsampled coord (out*stride + k - padding)
        # lies inside the upsampled image and nearest-maps to source index src.
        pos = jnp.arange(S_out)[None, :] * stride + jnp.arange(K_)[:, None] - padding
        valid = (pos >= 0) & (pos < S_in * scale)
        src = jnp.where(valid, pos // scale, -1)
        return (src[:, None, :] == jnp.arange(S_in)[None, :, None]).astype(w_oihw.dtype)

    SH = sel(KH, H, Hout)                                   # (KH, H, Hout)
    SW = sel(KW, W, Wout)                                   # (KW, W, Wout)
    G6 = jnp.einsum('ocuv,uhy,vwx->chwoyx', w_oihw, SH, SW) # (C,H,W,Cout,Ho,Wo)
    return G6.reshape(C * H * W, Cout * Hout * Wout), Hout, Wout


def _fused_kernel(x_ref, wb_ref, g_ref, b_ref, o_ref):
    """One batch element per grid step.
    x_ref : (L, C*H*W)  all frames (whole temporal slab resident -> halo free)
    wb_ref: (3, C*H*W)  TSM taps pre-broadcast per channel over H*W lanes
    g_ref : (C*H*W, Cout*Hout*Wout)  folded upsample+pad+conv matrix
    b_ref : (1, Cout*Hout*Wout)      folded conv bias
    o_ref : (L, Cout*Hout*Wout)
    """
    x = x_ref[...]                                            # (L, K) f32
    zero = jnp.zeros((1, x.shape[1]), x.dtype)
    x_prev = jnp.concatenate([zero, x[:-1]], axis=0)          # zero pad at t = 0
    x_next = jnp.concatenate([x[1:], zero], axis=0)           # zero pad at t = L-1
    # LearnableTSM: per-channel 3-tap temporal conv (pure VPU, f32).
    y = (wb_ref[0:1, :] * x_prev
         + wb_ref[1:2, :] * x
         + wb_ref[2:3, :] * x_next)
    # Upsample + pad + 3x3 conv + bias as ONE lane-dense MXU matmul.
    g = g_ref[...]
    out = jnp.dot(y.astype(g.dtype), g, preferred_element_type=jnp.float32)
    o_ref[...] = (out + b_ref[...]).astype(o_ref.dtype)


def tsm_deconv_fused(x_blk, wb, G, bias_row):
    """x_blk: (B, L, C*H*W) -> (B, L, Cout*Hout*Wout)."""
    B, L, K = x_blk.shape
    Kg, Ncol = G.shape
    assert Kg == K
    return pl.pallas_call(
        _fused_kernel,
        out_shape=jax.ShapeDtypeStruct((B, L, Ncol), x_blk.dtype),
        grid=(B,),
        in_specs=[
            pl.BlockSpec((None, L, K), lambda b: (b, 0, 0)),
            pl.BlockSpec((3, K), lambda b: (0, 0)),        # constant block: DMA'd once
            pl.BlockSpec((K, Ncol), lambda b: (0, 0)),     # constant block: DMA'd once
            pl.BlockSpec((1, Ncol), lambda b: (0, 0)),
        ],
        out_specs=pl.BlockSpec((None, L, Ncol), lambda b: (b, 0, 0)),
        compiler_params=pltpu.CompilerParams(dimension_semantics=("parallel",)),
    )(x_blk, wb, G, bias_row)


if __name__ == "__main__":
    # Module config: NN3Dby2DTSMDeconv(4, 8, kernel_size=3, stride=1, padding=1, scale_factor=2)
    B, Cin, L, H, W = 2, 4, 4, 8, 8
    Cout, KS, stride, padding, scale = 8, 3, 1, 1, 2
    shift_ratio, shift_groups = 0.5, 2

    key = jax.random.PRNGKey(0)
    kx, kw, kb = jax.random.split(key, 3)
    xs = jax.random.normal(kx, (B, Cin, L, H, W), jnp.float32)

    # --- Conv2d parameters (PyTorch OIHW) + spectral normalisation -----------
    w_conv = jax.random.normal(kw, (Cout, Cin, KS, KS), jnp.float32) * 0.1
    b_conv = jax.random.normal(kb, (Cout,), jnp.float32) * 0.1
    # TODO(synk): torch spectral_norm runs ONE power-iteration per forward with a
    # persistent random `u` buffer; here we use a converged power iteration.
    w_mat = w_conv.reshape(Cout, -1)
    v = jnp.ones((w_mat.shape[1],), jnp.float32) / jnp.sqrt(w_mat.shape[1])
    for _ in range(30):
        u = w_mat @ v
        u = u / (jnp.linalg.norm(u) + 1e-12)
        v = w_mat.T @ u
        v = v / (jnp.linalg.norm(v) + 1e-12)
    sigma = u @ (w_mat @ v)
    w_sn = w_conv / sigma

    # --- LearnableTSM shift-conv weights (shift_groups=2, shift_width=3) -----
    # Canonical TSM init: group 0 takes x[t-1], group 1 takes x[t+1].
    shift_w = jnp.array([[1.0, 0.0, 0.0],
                         [0.0, 0.0, 1.0]], jnp.float32)
    ns = int(Cin * shift_ratio)
    assert ns % shift_groups == 0
    w_pc = jnp.zeros((Cin, 3), jnp.float32).at[:, 1].set(1.0)   # pass-through taps
    w_pc = w_pc.at[:ns].set(shift_w[jnp.arange(ns) % shift_groups])

    # --- init-time weight folding (done once, not per forward) ---------------
    G, Hout, Wout = build_fold_matrix(w_sn, scale=scale, stride=stride,
                                      padding=padding, H=H, W=W)
    if MXU_INPUT_DTYPE != jnp.float32:
        G = G.astype(MXU_INPUT_DTYPE)
    wb = jnp.repeat(w_pc.T[:, :, None], H * W, axis=2).reshape(3, Cin * H * W)
    bias_row = jnp.repeat(b_conv, Hout * Wout).reshape(1, Cout * Hout * Wout)

    # ------------------------------- forward ----------------------------------
    @jax.jit
    def forward(xs, wb, G, bias_row):
        B_, C_, L_, H_, W_ = xs.shape
        # One tiny transpose of the ORIGINAL (not upsampled) input; every
        # 4x-larger intermediate (upsample/pad/im2col) lives only in VMEM.
        x_blk = xs.transpose(0, 2, 1, 3, 4).reshape(B_, L_, C_ * H_ * W_)
        out_flat = tsm_deconv_fused(x_blk, wb, G, bias_row)     # (B, L, Cout*Ho*Wo)
        out = out_flat.reshape(B_, L_, Cout, Hout, Wout)
        return out.transpose(0, 2, 1, 3, 4)                     # (B, Cout, L, Ho, Wo)

    out = jax.block_until_ready(forward(xs, wb, G, bias_row))

    # ---------------------------- pure-JAX reference --------------------------
    def reference(xs):
        x = jnp.repeat(jnp.repeat(xs, scale, axis=3), scale, axis=4)
        B_, C_, L_, H_, W_ = x.shape
        xp = jnp.pad(x, ((0, 0), (0, 0), (1, 1), (0, 0), (0, 0)))
        y = (w_pc[:, 0][None, :, None, None, None] * xp[:, :, 0:L_]
             + w_pc[:, 1][None, :, None, None, None] * xp[:, :, 1:L_ + 1]
             + w_pc[:, 2][None, :, None, None, None] * xp[:, :, 2:L_ + 2])
        frames = y.transpose(0, 2, 1, 3, 4).reshape(B_ * L_, C_, H_, W_)
        o = lax.conv_general_dilated(
            frames, w_sn, window_strides=(stride, stride),
            padding=((padding, padding), (padding, padding)),
            dimension_numbers=("NCHW", "OIHW", "NCHW"))
        o = o + b_conv[None, :, None, None]
        _, Co, Ho, Wo = o.shape
        return o.reshape(B_, L_, Co, Ho, Wo).transpose(0, 2, 1, 3, 4)

    ref = reference(xs)
    assert out.shape == (B, Cout, L, H * scale, W * scale), out.shape
    err = float(jnp.max(jnp.abs(out - ref)))
    assert err < 2e-3, f"max abs err {err}"
    print("KERNEL_OK")
</pallas_src>

<mosaic_0001>
module attributes {stable_mosaic.version = 11 : i64} {
  func.func @_fused_kernel(%arg0: i32, %arg1: memref<1x4x256xf32, #tpu.memory_space<vmem>>, %arg2: memref<3x256xf32, #tpu.memory_space<vmem>>, %arg3: memref<256x2048xf32, #tpu.memory_space<vmem>>, %arg4: memref<1x2048xf32, #tpu.memory_space<vmem>>, %arg5: memref<1x4x2048xf32, #tpu.memory_space<vmem>>) attributes {dimension_semantics = [#tpu.dimension_semantics<parallel>], iteration_bounds = array<i64: 2>, scalar_prefetch = 0 : i64, scratch_operands = 0 : i64, tpu.core_type = #tpu.core_type<tc>, window_params = [{transform_indices = @transform_0, window_bounds = array<i64: 1, 4, 256>}, {pipeline_mode = #tpu.pipeline_mode<synchronous>, transform_indices = @transform_1, window_bounds = array<i64: 3, 256>}, {pipeline_mode = #tpu.pipeline_mode<synchronous>, transform_indices = @transform_2, window_bounds = array<i64: 256, 2048>}, {pipeline_mode = #tpu.pipeline_mode<synchronous>, transform_indices = @transform_3, window_bounds = array<i64: 1, 2048>}, {transform_indices = @transform_4, window_bounds = array<i64: 1, 4, 2048>}]} {
    %c0 = arith.constant 0 : index
    %c0_0 = arith.constant 0 : index
    %c0_1 = arith.constant 0 : index
    %0 = vector.load %arg1[%c0, %c0_0, %c0_1] : memref<1x4x256xf32, #tpu.memory_space<vmem>>, vector<1x4x256xf32>
    %1 = vector.shape_cast %0 : vector<1x4x256xf32> to vector<4x256xf32>
    %cst = arith.constant 0.000000e+00 : f32
    %2 = vector.broadcast %cst : f32 to vector<1x256xf32>
    %3 = vector.extract_strided_slice %1 {offsets = [0, 0], sizes = [3, 256], strides = [1, 1]} : vector<4x256xf32> to vector<3x256xf32>
    %4 = tpu.concatenate %2, %3 in 0 : vector<1x256xf32>, vector<3x256xf32> -> vector<4x256xf32>
    %5 = vector.extract_strided_slice %1 {offsets = [1, 0], sizes = [3, 256], strides = [1, 1]} : vector<4x256xf32> to vector<3x256xf32>
    %6 = tpu.concatenate %5, %2 in 0 : vector<3x256xf32>, vector<1x256xf32> -> vector<4x256xf32>
    %c0_2 = arith.constant 0 : index
    %c0_3 = arith.constant 0 : index
    %7 = vector.load %arg2[%c0_2, %c0_3] : memref<3x256xf32, #tpu.memory_space<vmem>>, vector<1x256xf32>
    %8 = vector.broadcast %7 : vector<1x256xf32> to vector<4x256xf32>
    %9 = arith.mulf %8, %4 : vector<4x256xf32>
    %c1 = arith.constant 1 : index
    %c0_4 = arith.constant 0 : index
    %10 = vector.load %arg2[%c1, %c0_4] : memref<3x256xf32, #tpu.memory_space<vmem>>, vector<1x256xf32>
    %11 = vector.broadcast %10 : vector<1x256xf32> to vector<4x256xf32>
    %12 = arith.mulf %11, %1 : vector<4x256xf32>
    %13 = arith.addf %9, %12 : vector<4x256xf32>
    %c2 = arith.constant 2 : index
    %c0_5 = arith.constant 0 : index
    %14 = vector.load %arg2[%c2, %c0_5] : memref<3x256xf32, #tpu.memory_space<vmem>>, vector<1x256xf32>
    %15 = vector.broadcast %14 : vector<1x256xf32> to vector<4x256xf32>
    %16 = arith.mulf %15, %6 : vector<4x256xf32>
    %17 = arith.addf %13, %16 : vector<4x256xf32>
    %c0_6 = arith.constant 0 : index
    %c0_7 = arith.constant 0 : index
    %18 = vector.load %arg3[%c0_6, %c0_7] : memref<256x2048xf32, #tpu.memory_space<vmem>>, vector<256x2048xf32>
    %cst_8 = arith.constant dense<0.000000e+00> : vector<4x2048xf32>
    %19 = tpu.matmul %17, %18, %cst_8 {dimension_numbers = #tpu.dot_dimension_numbers<[1], [0], [0], [1], [0, 0, 1, 1], [], []>} : vector<4x256xf32>, vector<256x2048xf32>, vector<4x2048xf32> -> vector<4x2048xf32>
    %c0_9 = arith.constant 0 : index
    %c0_10 = arith.constant 0 : index
    %20 = vector.load %arg4[%c0_9, %c0_10] : memref<1x2048xf32, #tpu.memory_space<vmem>>, vector<1x2048xf32>
    %21 = vector.broadcast %20 : vector<1x2048xf32> to vector<4x2048xf32>
    %22 = arith.addf %19, %21 : vector<4x2048xf32>
    %c0_11 = arith.constant 0 : index
    %c0_12 = arith.constant 0 : index
    %c0_13 = arith.constant 0 : index
    %23 = vector.load %arg5[%c0_11, %c0_12, %c0_13] : memref<1x4x2048xf32, #tpu.memory_space<vmem>>, vector<1x4x2048xf32>
    %24 = vector.shape_cast %23 : vector<1x4x2048xf32> to vector<4x2048xf32>
    %25 = vector.shape_cast %22 : vector<4x2048xf32> to vector<1x4x2048xf32>
    tpu.vector_store %arg5[%c0_11, %c0_12, %c0_13], %25 {strides = array<i32>} : memref<1x4x2048xf32, #tpu.memory_space<vmem>>, vector<1x4x2048xf32>,
    return
  }
  func.func @transform_0(%arg0: i32) -> (i32, i32, i32) {
    %c0_i32 = arith.constant 0 : i32
    %c0_i32_0 = arith.constant 0 : i32
    %c0_i32_1 = arith.constant 0 : i32
    return %arg0, %c0_i32, %c0_i32_0 : i32, i32, i32
  }
  func.func @transform_1(%arg0: i32) -> (i32, i32) {
    %c0_i32 = arith.constant 0 : i32
    %c0_i32_0 = arith.constant 0 : i32
    %c0_i32_1 = arith.constant 0 : i32
    return %c0_i32, %c0_i32_0 : i32, i32
  }
  func.func @transform_2(%arg0: i32) -> (i32, i32) {
    %c0_i32 = arith.constant 0 : i32
    %c0_i32_0 = arith.constant 0 : i32
    %c0_i32_1 = arith.constant 0 : i32
    return %c0_i32, %c0_i32_0 : i32, i32
  }
  func.func @transform_3(%arg0: i32) -> (i32, i32) {
    %c0_i32 = arith.constant 0 : i32
    %c0_i32_0 = arith.constant 0 : i32
    %c0_i32_1 = arith.constant 0 : i32
    return %c0_i32, %c0_i32_0 : i32, i32
  }
  func.func @transform_4(%arg0: i32) -> (i32, i32, i32) {
    %c0_i32 = arith.constant 0 : i32
    %c0_i32_0 = arith.constant 0 : i32
    %c0_i32_1 = arith.constant 0 : i32
    return %arg0, %c0_i32, %c0_i32_0 : i32, i32, i32
  }
}

</mosaic_0001>

<llo_original>
// kernel: forward.1
$region0: #{forward.1}
  #allocation0 [shape = 'u32[]', space=smem, size = 0x4, offset = 0x4, fixed_abs, tag = 'smem constant byte address 0x4 - core index']
  #allocation1 [shape = 'u32[144,128]{1,0:T(1,128)}', space=vmem, size = 0x12000, scoped, tag = 'internal scratch']
  %s0 = inlined_call_operand.vmem [shape: f32[2,4,256], index: 0, kind: input, shape index: {}]
  %s1 = inlined_call_operand.hbm [shape: f32[3,256], index: 1, kind: input, shape index: {}]
  %s2 = inlined_call_operand.hbm [shape: f32[256,2048], index: 2, kind: input, shape index: {}]
  %s3 = inlined_call_operand.hbm [shape: f32[1,2048], index: 3, kind: input, shape index: {}]
  %s4 = inlined_call_operand.vmem [shape: f32[2,4,2048], index: 4, kind: output, shape index: {}]
  %s5 = sld [smem:[#allocation0]]
  $region61: #{forward.1} parent=0
    _
  %s7 = ssub.s32 1, %s5
  %s8 = scalar_select 0, %s7, %s5
  $region1: #{forward.1} parent=0
    #allocation2 [shape = 'u8[4096]{0}', space=vmem, size = 0x1000, scoped, tag = 'input window, operand 1, single buffered']
    #allocation3 [shape = 's32[2]{0}', space=sflag, size = 0x8, scoped, tag = 'scoped memory for forward.1']
    #allocation4 [shape = 'u8[2097152]{0}', space=vmem, size = 0x200000, scoped, tag = 'input window, operand 2, single buffered']
    #allocation5 [shape = 's32[1]{0}', space=sflag, size = 0x4, scoped, tag = 'scoped memory for forward.1']
    #allocation6 [shape = 'u8[8192]{0}', space=vmem, size = 0x2000, scoped, tag = 'input window, operand 3, single buffered']
    %9 = vsyncpa [#allocation3], 0
    %10 = vsyncpa [#allocation5], 0
    loop: start=0, step=1, limit=4
    $region2: #{forward.1} parent=1 // loop_pre_header
      _
    $region3: #{forward.1} parent=1 // loop_header
      %s12 = sphi 0, %s16
      %p13 = scmp.ge.s32.totalorder %s12, 4
      %s22 = sphi 0, %s24
      %s25 = sphi 0, %s22
      %s26 = sphi 0, %s25
      %s42 = sphi 0, %s26
      %s46 = sphi 0, %s46
      %s48 = sphi 0, %s46
      %s49 = sphi 0, %s48
      %s63 = sphi 0, %s49
      %s67 = sphi 0, %s67
      %s69 = sphi 0, %s67
      %s70 = sphi 0, %s69
      %s84 = sphi 0, %s70
      %s88 = sphi 0, %s88
      %s90 = sphi 0, %s88
      %s91 = sphi 0, %s90
      %s105 = sphi 0, %s91
      %s111 = sphi 0, %s113
      %s114 = sphi 0, %s111
      %s115 = sphi 0, %s114
      %s131 = sphi 0, %s115
    $region4: #{forward.1} parent=1 // loop_header_branch
      %15 = sbr.rel (%p13) target = $region8
    $region5: #{forward.1} parent=1 // loop_body
      %s17 = ssub.s32 %s12, 1
      %s18 = ssub.s32 %s12, 2
      %s19 = sadd.s32 %s12, 1
      %s20 = ssub.s32 %s12, %s19
      %p21 = scmp.eq.s32.totalorder %s20, 0
      %s23 = sadd.s32 %s22, 1
      %s24 = scalar_select %p21, %s22, %s23
      %p27 = pneg %p21
      %p28 = scmp.eq.s32.totalorder %s12, 1
      %p29 = por %p27, %p28
      %p30 = scmp.ne.s32.totalorder %s22, %s25
      %p31 = scmp.eq.s32.totalorder %s12, 0
      %p32 = por %p30, %p31
      %p33 = scmp.ne.s32.totalorder %s22, %s25
      %p34 = scmp.eq.s32.totalorder %s17, 1
      %p35 = por %p33, %p34
      %p36 = scmp.ne.s32.totalorder %s25, %s26
      %p37 = scmp.eq.s32.totalorder %s17, 0
      %p38 = por %p36, %p37
      %p39 = scmp.ne.s32.totalorder %s25, %s26
      %p40 = scmp.eq.s32.totalorder %s18, 1
      %p41 = por %p39, %p40
      %p43 = scmp.ne.s32.totalorder %s26, %s42
      %p44 = scmp.eq.s32.totalorder %s18, 0
      %p45 = por %p43, %p44
      %s47 = sadd.s32 %s46, 1
      %p50 = scmp.eq.s32.totalorder %s12, 1
      %p51 = scmp.ne.s32.totalorder %s46, %s48
      %p52 = scmp.eq.s32.totalorder %s12, 0
      %p53 = por %p51, %p52
      %p54 = scmp.ne.s32.totalorder %s46, %s48
      %p55 = scmp.eq.s32.totalorder %s17, 1
      %p56 = por %p54, %p55
      %p57 = scmp.ne.s32.totalorder %s48, %s49
      %p58 = scmp.eq.s32.totalorder %s17, 0
      %p59 = por %p57, %p58
      %p60 = scmp.ne.s32.totalorder %s48, %s49
      %p61 = scmp.eq.s32.totalorder %s18, 1
      %p62 = por %p60, %p61
      %p64 = scmp.ne.s32.totalorder %s49, %s63
      %p65 = scmp.eq.s32.totalorder %s18, 0
      %p66 = por %p64, %p65
      %s68 = sadd.s32 %s67, 1
      %p71 = scmp.eq.s32.totalorder %s12, 1
      %p72 = scmp.ne.s32.totalorder %s67, %s69
      %p73 = scmp.eq.s32.totalorder %s12, 0
      %p74 = por %p72, %p73
      %p75 = scmp.ne.s32.totalorder %s67, %s69
      %p76 = scmp.eq.s32.totalorder %s17, 1
      %p77 = por %p75, %p76
      %p78 = scmp.ne.s32.totalorder %s69, %s70
      %p79 = scmp.eq.s32.totalorder %s17, 0
      %p80 = por %p78, %p79
      %p81 = scmp.ne.s32.totalorder %s69, %s70
      %p82 = scmp.eq.s32.totalorder %s18, 1
      %p83 = por %p81, %p82
      %p85 = scmp.ne.s32.totalorder %s70, %s84
      %p86 = scmp.eq.s32.totalorder %s18, 0
      %p87 = por %p85, %p86
      %s89 = sadd.s32 %s88, 1
      %p92 = scmp.eq.s32.totalorder %s12, 1
      %p93 = scmp.ne.s32.totalorder %s88, %s90
      %p94 = scmp.eq.s32.totalorder %s12, 0
      %p95 = por %p93, %p94
      %p96 = scmp.ne.s32.totalorder %s88, %s90
      %p97 = scmp.eq.s32.totalorder %s17, 1
      %p98 = por %p96, %p97
      %p99 = scmp.ne.s32.totalorder %s90, %s91
      %p100 = scmp.eq.s32.totalorder %s17, 0
      %p101 = por %p99, %p100
      %p102 = scmp.ne.s32.totalorder %s90, %s91
      %p103 = scmp.eq.s32.totalorder %s18, 1
      %p104 = por %p102, %p103
      %p106 = scmp.ne.s32.totalorder %s91, %s105
      %p107 = scmp.eq.s32.totalorder %s18, 0
      %p108 = por %p106, %p107
      %s109 = ssub.s32 %s12, %s19
      %p110 = scmp.eq.s32.totalorder %s109, 0
      %s112 = sadd.s32 %s111, 1
      %s113 = scalar_select %p110, %s111, %s112
      %p116 = pneg %p110
      %p117 = scmp.eq.s32.totalorder %s12, 1
      %p118 = por %p116, %p117
      %p119 = scmp.ne.s32.totalorder %s111, %s114
      %p120 = scmp.eq.s32.totalorder %s12, 0
      %p121 = por %p119, %p120
      %p122 = scmp.ne.s32.totalorder %s111, %s114
      %p123 = scmp.eq.s32.totalorder %s17, 1
      %p124 = por %p122, %p123
      %p125 = scmp.ne.s32.totalorder %s114, %s115
      %p126 = scmp.eq.s32.totalorder %s17, 0
      %p127 = por %p125, %p126
      %p128 = scmp.ne.s32.totalorder %s114, %s115
      %p129 = scmp.eq.s32.totalorder %s18, 1
      %p130 = por %p128, %p129
      %p132 = scmp.ne.s32.totalorder %s115, %s131
      %p133 = scmp.eq.s32.totalorder %s18, 0
      %p134 = por %p132, %p133
      %p135 = scmp.le.s32.totalorder 1, %s12
      %p136 = scmp.lt.s32.totalorder %s12, 3
      %p137 = pnand %p135, %p136
      %p138 = pneg %p137
      // Predicated region
      $region9: #{forward.1} parent=5 // pred_check
        _
      $region10: #{forward.1} parent=5 // pred_check_branch
        %140 = sbr.rel (%p137) target = $region12
      $region11: #{forward.1} parent=5 // pred_region
        %s141 = ssub.s32 %s12, 1
        // Predicated region
        $region13: #{forward.1} parent=11 // pred_check
          %p142 = pneg %p59
        $region14: #{forward.1} parent=11 // pred_check_branch
          %144 = sbr.rel (%p142) target = $region16
        $region15: #{forward.1} parent=11 // pred_region
          %s146 = ssub.s32 128, 128
          %147 = vsyncadd [#allocation3], %s146
          %s149 = sshll.u32 [#allocation2], 4
          %s150 = int_to_ptr.vmem [resolvable:$true] %s149
          %152 = dma.hbm_to_vmem [thread:$0]  %s1, 128, %s150, [#allocation3]
        $region16: #{forward.1} parent=11 // pred_fallthru
          _
        // Predicated region
        $region17: #{forward.1} parent=11 // pred_check
          %p153 = pneg %p80
        $region18: #{forward.1} parent=11 // pred_check_branch
          %155 = sbr.rel (%p153) target = $region20
        $region19: #{forward.1} parent=11 // pred_region
          %s157 = ssub.s32 65536, 65536
          %158 = vsyncadd [#allocation5], %s157
          %s159 = sshll.u32 [#allocation4], 4
          %s160 = int_to_ptr.vmem [resolvable:$true] %s159
          %165 = dma.hbm_to_vmem [thread:$0]  %s2, 65536, %s160, [#allocation5], 2048, 2048, 128
        $region20: #{forward.1} parent=11 // pred_fallthru
          _
        // Predicated region
        $region21: #{forward.1} parent=11 // pred_check
          %p166 = pneg %p101
        $region22: #{forward.1} parent=11 // pred_check_branch
          %168 = sbr.rel (%p166) target = $region24
        $region23: #{forward.1} parent=11 // pred_region
          %s170 = ssub.s32 256, 256
          %171 = vsyncadd [#allocation5], %s170
          %s173 = sshll.u32 [#allocation6], 4
          %s174 = int_to_ptr.vmem [resolvable:$true] %s173
          %176 = dma.hbm_to_vmem [thread:$0]  %s3, 256, %s174, [#allocation5]
        $region24: #{forward.1} parent=11 // pred_fallthru
          _
      $region12: #{forward.1} parent=5 // pred_fallthru
        _
      %p177 = scmp.lt.s32.totalorder %s12, 2
      // Predicated region
      $region25: #{forward.1} parent=5 // pred_check
        %p178 = pneg %p177
      $region26: #{forward.1} parent=5 // pred_check_branch
        %180 = sbr.rel (%p178) target = $region28
      $region27: #{forward.1} parent=5 // pred_region
        // Predicated region
        $region29: #{forward.1} parent=27 // pred_check
          %p181 = pneg %p32
        $region30: #{forward.1} parent=27 // pred_check_branch
          %183 = sbr.rel (%p181) target = $region32
        $region31: #{forward.1} parent=27 // pred_region
          %p184 = scmp.lt.s32.totalorder %s12, 1
          %s185 = scalar_select %p184, %s12, 1
          %s186 = smul.addr %s185, 2
          %s187 = smul.addr %s186, 4
          %s188 = scalar_lea.vmem %s0, %s187
        $region32: #{forward.1} parent=27 // pred_fallthru
          _
      $region28: #{forward.1} parent=5 // pred_fallthru
        _
      %p189 = scmp.le.s32.totalorder 1, %s12
      %p190 = scmp.lt.s32.totalorder %s12, 3
      %p191 = pnand %p189, %p190
      %p192 = pneg %p191
      // Predicated region
      $region33: #{forward.1} parent=5 // pred_check
        _
      $region34: #{forward.1} parent=5 // pred_check_branch
        %194 = sbr.rel (%p191) target = $region36
      $region35: #{forward.1} parent=5 // pred_region
        %s195 = ssub.s32 %s12, 1
        // Predicated region
        $region37: #{forward.1} parent=35 // pred_check
          %p196 = pneg %p59
        $region38: #{forward.1} parent=35 // pred_check_branch
          %198 = sbr.rel (%p196) target = $region40
        $region39: #{forward.1} parent=35 // pred_region
          %199 = dma.done [#allocation3], 128
        $region40: #{forward.1} parent=35 // pred_fallthru
          _
        // Predicated region
        $region41: #{forward.1} parent=35 // pred_check
          %p200 = pneg %p80
        $region42: #{forward.1} parent=35 // pred_check_branch
          %202 = sbr.rel (%p200) target = $region44
        $region43: #{forward.1} parent=35 // pred_region
          %203 = dma.done [#allocation5], 65536
        $region44: #{forward.1} parent=35 // pred_fallthru
          _
        // Predicated region
        $region45: #{forward.1} parent=35 // pred_check
          %p204 = pneg %p101
        $region46: #{forward.1} parent=35 // pred_check_branch
          %206 = sbr.rel (%p204) target = $region48
        $region47: #{forward.1} parent=35 // pred_region
          %207 = dma.done [#allocation5], 256
        $region48: #{forward.1} parent=35 // pred_fallthru
          _
        %p208 = scmp.lt.s32.totalorder %s17, 1
        %s209 = scalar_select %p208, %s17, 1
        %s210 = smul.addr %s209, 2
        %s211 = smul.addr %s210, 4
        %s212 = scalar_lea.vmem %s0, %s211
        %p213 = pneg %p38
        %p214 = pneg %p35
        %p215 = pneg %p59
        %p216 = pneg %p56
        %p217 = pneg %p80
        %p218 = pneg %p77
        %p219 = pneg %p101
        %p220 = pneg %p98
        %p221 = pneg %p127
        %p222 = pneg %p124
        %p223 = scmp.lt.s32.totalorder %s17, 1
        %s224 = scalar_select %p223, %s17, 1
        %s225 = smul.addr %s224, 16
        %s226 = smul.addr %s225, 4
        %s227 = scalar_lea.vmem %s4, %s226
        %p228 = scmp.lt.s32.totalorder %s17, 1
        %s229 = scalar_select %p228, %s17, 1
        %s230 = smul.addr %s229, 2
        %s231 = smul.addr %s230, 4
        %s232 = scalar_lea.vmem %s0, %s231
        %p233 = scmp.lt.s32.totalorder %s17, 1
        %s234 = scalar_select %p233, %s17, 1
        %s235 = smul.addr %s234, 16
        %s236 = smul.addr %s235, 4
        %s237 = scalar_lea.vmem %s4, %s236
        %v238 = vld [vmem:[%s232] sm:$0xff]
        %v240 = vcombine.high %v238, %v238
        %v241 = vrot.slane %v238, 7
        %v242 = vrot.slane %v240, 7
        %vm245 = vcmask 1040384
        %v246 = vsel %vm245, 0.0, %v241
        %v247 = vsel %vm245, 0.0, %v242
        %v248 = vrot.slane %v238, 1
        %v249 = vrot.slane %v240, 1
        %vm252 = vcmask 1042432
        %v253 = vsel %vm252, %v248, 0.0
        %v254 = vsel %vm252, %v249, 0.0
        %v255 = vld [vmem:[#allocation2] ss:$4 sm:$0x3]
        %v257 = vlaneseq
        %v258 = vshrl.u32 %v257, 7
        %v259 = vsub.s32 0, %v258
        %v260 = vrot.slane %v255, %v259
        %v261 = vlaneseq
        %v262 = vshrl.u32 %v261, 7
        %v263 = vsub.s32 1, %v262
        %v264 = vrot.slane %v255, %v263
        %v267 = vmul.f32 %v260, %v246
        %v268 = vmul.f32 %v264, %v247
        %s269 = scalar_lea.vmem [#allocation2], 1
        %v270 = vld [vmem:[%s269] ss:$4 sm:$0x3]
        %v272 = vlaneseq
        %v273 = vshrl.u32 %v272, 7
        %v274 = vsub.s32 0, %v273
        %v275 = vrot.slane %v270, %v274
        %v276 = vlaneseq
        %v277 = vshrl.u32 %v276, 7
        %v278 = vsub.s32 1, %v277
        %v279 = vrot.slane %v270, %v278
        %v283 = vmul.f32 %v275, %v238
        %v284 = vmul.f32 %v279, %v240
        %v285 = vadd.f32 %v267, %v283
        %v286 = vadd.f32 %v268, %v284
        %s287 = scalar_lea.vmem [#allocation2], 2
        %v288 = vld [vmem:[%s287] ss:$4 sm:$0x3]
        %v290 = vlaneseq
        %v291 = vshrl.u32 %v290, 7
        %v292 = vsub.s32 0, %v291
        %v293 = vrot.slane %v288, %v292
        %v294 = vlaneseq
        %v295 = vshrl.u32 %v294, 7
        %v296 = vsub.s32 1, %v295
        %v297 = vrot.slane %v288, %v296
        %v300 = vmul.f32 %v293, %v253
        %v301 = vmul.f32 %v297, %v254
        %v302 = vadd.f32 %v285, %v300
        %v303 = vadd.f32 %v286, %v301
        %v304 = vld [vmem:[#allocation4] sm:$0xff]
        %v305 = vld [vmem:[#allocation4 + $0x8] sm:$0xff]
        %v306 = vld [vmem:[#allocation4 + $0x10] sm:$0xff]
        %v307 = vld [vmem:[#allocation4 + $0x18] sm:$0xff]
        %v308 = vld [vmem:[#allocation4 + $0x20] sm:$0xff]
        %v309 = vld [vmem:[#allocation4 + $0x28] sm:$0xff]
        %v310 = vld [vmem:[#allocation4 + $0x30] sm:$0xff]
        %v311 = vld [vmem:[#allocation4 + $0x38] sm:$0xff]
        %v312 = vld [vmem:[#allocation4 + $0x40] sm:$0xff]
        %v313 = vld [vmem:[#allocation4 + $0x48] sm:$0xff]
        %v314 = vld [vmem:[#allocation4 + $0x50] sm:$0xff]
        %v315 = vld [vmem:[#allocation4 + $0x58] sm:$0xff]
        %v316 = vld [vmem:[#allocation4 + $0x60] sm:$0xff]
        %v317 = vld [vmem:[#allocation4 + $0x68] sm:$0xff]
        %v318 = vld [vmem:[#allocation4 + $0x70] sm:$0xff]
        %v319 = vld [vmem:[#allocation4 + $0x78] sm:$0xff]
        %v320 = vld [vmem:[#allocation4 + $0x80] sm:$0xff]
        %v321 = vld [vmem:[#allocation4 + $0x88] sm:$0xff]
        %v322 = vld [vmem:[#allocation4 + $0x90] sm:$0xff]
        %v323 = vld [vmem:[#allocation4 + $0x98] sm:$0xff]
        %v324 = vld [vmem:[#allocation4 + $0xa0] sm:$0xff]
        %v325 = vld [vmem:[#allocation4 + $0xa8] sm:$0xff]
        %v326 = vld [vmem:[#allocation4 + $0xb0] sm:$0xff]
        %v327 = vld [vmem:[#allocation4 + $0xb8] sm:$0xff]
        %v328 = vld [vmem:[#allocation4 + $0xc0] sm:$0xff]
        %v329 = vld [vmem:[#allocation4 + $0xc8] sm:$0xff]
        %v330 = vld [vmem:[#allocation4 + $0xd0] sm:$0xff]
        %v331 = vld [vmem:[#allocation4 + $0xd8] sm:$0xff]
        %v332 = vld [vmem:[#allocation4 + $0xe0] sm:$0xff]
        %v333 = vld [vmem:[#allocation4 + $0xe8] sm:$0xff]
        %v334 = vld [vmem:[#allocation4 + $0xf0] sm:$0xff]
        %v335 = vld [vmem:[#allocation4 + $0xf8] sm:$0xff]
        %v336 = vld [vmem:[#allocation4 + $0x100] sm:$0xff]
        %v337 = vld [vmem:[#allocation4 + $0x108] sm:$0xff]
        %v338 = vld [vmem:[#allocation4 + $0x110] sm:$0xff]
        %v339 = vld [vmem:[#allocation4 + $0x118] sm:$0xff]
        %v340 = vld [vmem:[#allocation4 + $0x120] sm:$0xff]
        %v341 = vld [vmem:[#allocation4 + $0x128] sm:$0xff]
        %v342 = vld [vmem:[#allocation4 + $0x130] sm:$0xff]
        %v343 = vld [vmem:[#allocation4 + $0x138] sm:$0xff]
        %v344 = vld [vmem:[#allocation4 + $0x140] sm:$0xff]
        %v345 = vld [vmem:[#allocation4 + $0x148] sm:$0xff]
        %v346 = vld [vmem:[#allocation4 + $0x150] sm:$0xff]
        %v347 = vld [vmem:[#allocation4 + $0x158] sm:$0xff]
        %v348 = vld [vmem:[#allocation4 + $0x160] sm:$0xff]
        %v349 = vld [vmem:[#allocation4 + $0x168] sm:$0xff]
        %v350 = vld [vmem:[#allocation4 + $0x170] sm:$0xff]
        %v351 = vld [vmem:[#allocation4 + $0x178] sm:$0xff]
        %v352 = vld [vmem:[#allocation4 + $0x180] sm:$0xff]
        %v353 = vld [vmem:[#allocation4 + $0x188] sm:$0xff]
        %v354 = vld [vmem:[#allocation4 + $0x190] sm:$0xff]
        %v355 = vld [vmem:[#allocation4 + $0x198] sm:$0xff]
        %v356 = vld [vmem:[#allocation4 + $0x1a0] sm:$0xff]
        %v357 = vld [vmem:[#allocation4 + $0x1a8] sm:$0xff]
        %v358 = vld [vmem:[#allocation4 + $0x1b0] sm:$0xff]
        %v359 = vld [vmem:[#allocation4 + $0x1b8] sm:$0xff]
        %v360 = vld [vmem:[#allocation4 + $0x1c0] sm:$0xff]
        %v361 = vld [vmem:[#allocation4 + $0x1c8] sm:$0xff]
        %v362 = vld [vmem:[#allocation4 + $0x1d0] sm:$0xff]
        %v363 = vld [vmem:[#allocation4 + $0x1d8] sm:$0xff]
        %v364 = vld [vmem:[#allocation4 + $0x1e0] sm:$0xff]
        %v365 = vld [vmem:[#allocation4 + $0x1e8] sm:$0xff]
        %v366 = vld [vmem:[#allocation4 + $0x1f0] sm:$0xff]
        %v367 = vld [vmem:[#allocation4 + $0x1f8] sm:$0xff]
        %v368 = vld [vmem:[#allocation4 + $0x200] sm:$0xff]
        %v369 = vld [vmem:[#allocation4 + $0x208] sm:$0xff]
        %v370 = vld [vmem:[#allocation4 + $0x210] sm:$0xff]
        %v371 = vld [vmem:[#allocation4 + $0x218] sm:$0xff]
        %v372 = vld [vmem:[#allocation4 + $0x220] sm:$0xff]
        %v373 = vld [vmem:[#allocation4 + $0x228] sm:$0xff]
        %v374 = vld [vmem:[#allocation4 + $0x230] sm:$0xff]
        %v375 = vld [vmem:[#allocation4 + $0x238] sm:$0xff]
        %v376 = vld [vmem:[#allocation4 + $0x240] sm:$0xff]
        %v377 = vld [vmem:[#allocation4 + $0x248] sm:$0xff]
        %v378 = vld [vmem:[#allocation4 + $0x250] sm:$0xff]
        %v379 = vld [vmem:[#allocation4 + $0x258] sm:$0xff]
        %v380 = vld [vmem:[#allocation4 + $0x260] sm:$0xff]
        %v381 = vld [vmem:[#allocation4 + $0x268] sm:$0xff]
        %v382 = vld [vmem:[#allocation4 + $0x270] sm:$0xff]
        %v383 = vld [vmem:[#allocation4 + $0x278] sm:$0xff]
        %v384 = vld [vmem:[#allocation4 + $0x280] sm:$0xff]
        %v385 = vld [vmem:[#allocation4 + $0x288] sm:$0xff]
        %v386 = vld [vmem:[#allocation4 + $0x290] sm:$0xff]
        %v387 = vld [vmem:[#allocation4 + $0x298] sm:$0xff]
        %v388 = vld [vmem:[#allocation4 + $0x2a0] sm:$0xff]
        %v389 = vld [vmem:[#allocation4 + $0x2a8] sm:$0xff]
        %v390 = vld [vmem:[#allocation4 + $0x2b0] sm:$0xff]
        %v391 = vld [vmem:[#allocation4 + $0x2b8] sm:$0xff]
        %v392 = vld [vmem:[#allocation4 + $0x2c0] sm:$0xff]
        %v393 = vld [vmem:[#allocation4 + $0x2c8] sm:$0xff]
        %v394 = vld [vmem:[#allocation4 + $0x2d0] sm:$0xff]
        %v395 = vld [vmem:[#allocation4 + $0x2d8] sm:$0xff]
        %v396 = vld [vmem:[#allocation4 + $0x2e0] sm:$0xff]
        %v397 = vld [vmem:[#allocation4 + $0x2e8] sm:$0xff]
        %v398 = vld [vmem:[#allocation4 + $0x2f0] sm:$0xff]
        %v399 = vld [vmem:[#allocation4 + $0x2f8] sm:$0xff]
        %v400 = vld [vmem:[#allocation4 + $0x300] sm:$0xff]
        %v401 = vld [vmem:[#allocation4 + $0x308] sm:$0xff]
        %v402 = vld [vmem:[#allocation4 + $0x310] sm:$0xff]
        %v403 = vld [vmem:[#allocation4 + $0x318] sm:$0xff]
        %v404 = vld [vmem:[#allocation4 + $0x320] sm:$0xff]
        %v405 = vld [vmem:[#allocation4 + $0x328] sm:$0xff]
        %v406 = vld [vmem:[#allocation4 + $0x330] sm:$0xff]
        %v407 = vld [vmem:[#allocation4 + $0x338] sm:$0xff]
        %v408 = vld [vmem:[#allocation4 + $0x340] sm:$0xff]
        %v409 = vld [vmem:[#allocation4 + $0x348] sm:$0xff]
        %v410 = vld [vmem:[#allocation4 + $0x350] sm:$0xff]
        %v411 = vld [vmem:[#allocation4 + $0x358] sm:$0xff]
        %v412 = vld [vmem:[#allocation4 + $0x360] sm:$0xff]
        %v413 = vld [vmem:[#allocation4 + $0x368] sm:$0xff]
        %v414 = vld [vmem:[#allocation4 + $0x370] sm:$0xff]
        %v415 = vld [vmem:[#allocation4 + $0x378] sm:$0xff]
        %v416 = vld [vmem:[#allocation4 + $0x380] sm:$0xff]
        %v417 = vld [vmem:[#allocation4 + $0x388] sm:$0xff]
        %v418 = vld [vmem:[#allocation4 + $0x390] sm:$0xff]
        %v419 = vld [vmem:[#allocation4 + $0x398] sm:$0xff]
        %v420 = vld [vmem:[#allocation4 + $0x3a0] sm:$0xff]
        %v421 = vld [vmem:[#allocation4 + $0x3a8] sm:$0xff]
        %v422 = vld [vmem:[#allocation4 + $0x3b0] sm:$0xff]
        %v423 = vld [vmem:[#allocation4 + $0x3b8] sm:$0xff]
        %v424 = vld [vmem:[#allocation4 + $0x3c0] sm:$0xff]
        %v425 = vld [vmem:[#allocation4 + $0x3c8] sm:$0xff]
        %v426 = vld [vmem:[#allocation4 + $0x3d0] sm:$0xff]
        %v427 = vld [vmem:[#allocation4 + $0x3d8] sm:$0xff]
        %v428 = vld [vmem:[#allocation4 + $0x3e0] sm:$0xff]
        %v429 = vld [vmem:[#allocation4 + $0x3e8] sm:$0xff]
        %v430 = vld [vmem:[#allocation4 + $0x3f0] sm:$0xff]
        %v431 = vld [vmem:[#allocation4 + $0x3f8] sm:$0xff]
        %v432 = vld [vmem:[#allocation4 + $0x400] sm:$0xff]
        %v433 = vld [vmem:[#allocation4 + $0x408] sm:$0xff]
        %v434 = vld [vmem:[#allocation4 + $0x410] sm:$0xff]
        %v435 = vld [vmem:[#allocation4 + $0x418] sm:$0xff]
        %v436 = vld [vmem:[#allocation4 + $0x420] sm:$0xff]
        %v437 = vld [vmem:[#allocation4 + $0x428] sm:$0xff]
        %v438 = vld [vmem:[#allocation4 + $0x430] sm:$0xff]
        %v439 = vld [vmem:[#allocation4 + $0x438] sm:$0xff]
        %v440 = vld [vmem:[#allocation4 + $0x440] sm:$0xff]
        %v441 = vld [vmem:[#allocation4 + $0x448] sm:$0xff]
        %v442 = vld [vmem:[#allocation4 + $0x450] sm:$0xff]
        %v443 = vld [vmem:[#allocation4 + $0x458] sm:$0xff]
        %v444 = vld [vmem:[#allocation4 + $0x460] sm:$0xff]
        %v445 = vld [vmem:[#allocation4 + $0x468] sm:$0xff]
        %v446 = vld [vmem:[#allocation4 + $0x470] sm:$0xff]
        %v447 = vld [vmem:[#allocation4 + $0x478] sm:$0xff]
        %v448 = vld [vmem:[#allocation4 + $0x480] sm:$0xff]
        %v449 = vld [vmem:[#allocation4 + $0x488] sm:$0xff]
        %v450 = vld [vmem:[#allocation4 + $0x490] sm:$0xff]
        %v451 = vld [vmem:[#allocation4 + $0x498] sm:$0xff]
        %v452 = vld [vmem:[#allocation4 + $0x4a0] sm:$0xff]
        %v453 = vld [vmem:[#allocation4 + $0x4a8] sm:$0xff]
        %v454 = vld [vmem:[#allocation4 + $0x4b0] sm:$0xff]
        %v455 = vld [vmem:[#allocation4 + $0x4b8] sm:$0xff]
        %v456 = vld [vmem:[#allocation4 + $0x4c0] sm:$0xff]
        %v457 = vld [vmem:[#allocation4 + $0x4c8] sm:$0xff]
        %v458 = vld [vmem:[#allocation4 + $0x4d0] sm:$0xff]
        %v459 = vld [vmem:[#allocation4 + $0x4d8] sm:$0xff]
        %v460 = vld [vmem:[#allocation4 + $0x4e0] sm:$0xff]
        %v461 = vld [vmem:[#allocation4 + $0x4e8] sm:$0xff]
        %v462 = vld [vmem:[#allocation4 + $0x4f0] sm:$0xff]
        %v463 = vld [vmem:[#allocation4 + $0x4f8] sm:$0xff]
        %v464 = vld [vmem:[#allocation4 + $0x500] sm:$0xff]
        %v465 = vld [vmem:[#allocation4 + $0x508] sm:$0xff]
        %v466 = vld [vmem:[#allocation4 + $0x510] sm:$0xff]
        %v467 = vld [vmem:[#allocation4 + $0x518] sm:$0xff]
        %v468 = vld [vmem:[#allocation4 + $0x520] sm:$0xff]
        %v469 = vld [vmem:[#allocation4 + $0x528] sm:$0xff]
        %v470 = vld [vmem:[#allocation4 + $0x530] sm:$0xff]
        %v471 = vld [vmem:[#allocation4 + $0x538] sm:$0xff]
        %v472 = vld [vmem:[#allocation4 + $0x540] sm:$0xff]
        %v473 = vld [vmem:[#allocation4 + $0x548] sm:$0xff]
        %v474 = vld [vmem:[#allocation4 + $0x550] sm:$0xff]
        %v475 = vld [vmem:[#allocation4 + $0x558] sm:$0xff]
        %v476 = vld [vmem:[#allocation4 + $0x560] sm:$0xff]
        %v477 = vld [vmem:[#allocation4 + $0x568] sm:$0xff]
        %v478 = vld [vmem:[#allocation4 + $0x570] sm:$0xff]
        %v479 = vld [vmem:[#allocation4 + $0x578] sm:$0xff]
        %v480 = vld [vmem:[#allocation4 + $0x580] sm:$0xff]
        %v481 = vld [vmem:[#allocation4 + $0x588] sm:$0xff]
        %v482 = vld [vmem:[#allocation4 + $0x590] sm:$0xff]
        %v483 = vld [vmem:[#allocation4 + $0x598] sm:$0xff]
        %v484 = vld [vmem:[#allocation4 + $0x5a0] sm:$0xff]
        %v485 = vld [vmem:[#allocation4 + $0x5a8] sm:$0xff]
        %v486 = vld [vmem:[#allocation4 + $0x5b0] sm:$0xff]
        %v487 = vld [vmem:[#allocation4 + $0x5b8] sm:$0xff]
        %v488 = vld [vmem:[#allocation4 + $0x5c0] sm:$0xff]
        %v489 = vld [vmem:[#allocation4 + $0x5c8] sm:$0xff]
        %v490 = vld [vmem:[#allocation4 + $0x5d0] sm:$0xff]
        %v491 = vld [vmem:[#allocation4 + $0x5d8] sm:$0xff]
        %v492 = vld [vmem:[#allocation4 + $0x5e0] sm:$0xff]
        %v493 = vld [vmem:[#allocation4 + $0x5e8] sm:$0xff]
        %v494 = vld [vmem:[#allocation4 + $0x5f0] sm:$0xff]
        %v495 = vld [vmem:[#allocation4 + $0x5f8] sm:$0xff]
        %v496 = vld [vmem:[#allocation4 + $0x600] sm:$0xff]
        %v497 = vld [vmem:[#allocation4 + $0x608] sm:$0xff]
        %v498 = vld [vmem:[#allocation4 + $0x610] sm:$0xff]
        %v499 = vld [vmem:[#allocation4 + $0x618] sm:$0xff]
        %v500 = vld [vmem:[#allocation4 + $0x620] sm:$0xff]
        %v501 = vld [vmem:[#allocation4 + $0x628] sm:$0xff]
        %v502 = vld [vmem:[#allocation4 + $0x630] sm:$0xff]
        %v503 = vld [vmem:[#allocation4 + $0x638] sm:$0xff]
        %v504 = vld [vmem:[#allocation4 + $0x640] sm:$0xff]
        %v505 = vld [vmem:[#allocation4 + $0x648] sm:$0xff]
        %v506 = vld [vmem:[#allocation4 + $0x650] sm:$0xff]
        %v507 = vld [vmem:[#allocation4 + $0x658] sm:$0xff]
        %v508 = vld [vmem:[#allocation4 + $0x660] sm:$0xff]
        %v509 = vld [vmem:[#allocation4 + $0x668] sm:$0xff]
        %v510 = vld [vmem:[#allocation4 + $0x670] sm:$0xff]
        %v511 = vld [vmem:[#allocation4 + $0x678] sm:$0xff]
        %v512 = vld [vmem:[#allocation4 + $0x680] sm:$0xff]
        %v513 = vld [vmem:[#allocation4 + $0x688] sm:$0xff]
        %v514 = vld [vmem:[#allocation4 + $0x690] sm:$0xff]
        %v515 = vld [vmem:[#allocation4 + $0x698] sm:$0xff]
        %v516 = vld [vmem:[#allocation4 + $0x6a0] sm:$0xff]
        %v517 = vld [vmem:[#allocation4 + $0x6a8] sm:$0xff]
        %v518 = vld [vmem:[#allocation4 + $0x6b0] sm:$0xff]
        %v519 = vld [vmem:[#allocation4 + $0x6b8] sm:$0xff]
        %v520 = vld [vmem:[#allocation4 + $0x6c0] sm:$0xff]
        %v521 = vld [vmem:[#allocation4 + $0x6c8] sm:$0xff]
        %v522 = vld [vmem:[#allocation4 + $0x6d0] sm:$0xff]
        %v523 = vld [vmem:[#allocation4 + $0x6d8] sm:$0xff]
        %v524 = vld [vmem:[#allocation4 + $0x6e0] sm:$0xff]
        %v525 = vld [vmem:[#allocation4 + $0x6e8] sm:$0xff]
        %v526 = vld [vmem:[#allocation4 + $0x6f0] sm:$0xff]
        %v527 = vld [vmem:[#allocation4 + $0x6f8] sm:$0xff]
        %v528 = vld [vmem:[#allocation4 + $0x700] sm:$0xff]
        %v529 = vld [vmem:[#allocation4 + $0x708] sm:$0xff]
        %v530 = vld [vmem:[#allocation4 + $0x710] sm:$0xff]
        %v531 = vld [vmem:[#allocation4 + $0x718] sm:$0xff]
        %v532 = vld [vmem:[#allocation4 + $0x720] sm:$0xff]
        %v533 = vld [vmem:[#allocation4 + $0x728] sm:$0xff]
        %v534 = vld [vmem:[#allocation4 + $0x730] sm:$0xff]
        %v535 = vld [vmem:[#allocation4 + $0x738] sm:$0xff]
        %v536 = vld [vmem:[#allocation4 + $0x740] sm:$0xff]
        %v537 = vld [vmem:[#allocation4 + $0x748] sm:$0xff]
        %v538 = vld [vmem:[#allocation4 + $0x750] sm:$0xff]
        %v539 = vld [vmem:[#allocation4 + $0x758] sm:$0xff]
        %v540 = vld [vmem:[#allocation4 + $0x760] sm:$0xff]
        %v541 = vld [vmem:[#allocation4 + $0x768] sm:$0xff]
        %v542 = vld [vmem:[#allocation4 + $0x770] sm:$0xff]
        %v543 = vld [vmem:[#allocation4 + $0x778] sm:$0xff]
        %v544 = vld [vmem:[#allocation4 + $0x780] sm:$0xff]
        %v545 = vld [vmem:[#allocation4 + $0x788] sm:$0xff]
        %v546 = vld [vmem:[#allocation4 + $0x790] sm:$0xff]
        %v547 = vld [vmem:[#allocation4 + $0x798] sm:$0xff]
        %v548 = vld [vmem:[#allocation4 + $0x7a0] sm:$0xff]
        %v549 = vld [vmem:[#allocation4 + $0x7a8] sm:$0xff]
        %v550 = vld [vmem:[#allocation4 + $0x7b0] sm:$0xff]
        %v551 = vld [vmem:[#allocation4 + $0x7b8] sm:$0xff]
        %v552 = vld [vmem:[#allocation4 + $0x7c0] sm:$0xff]
        %v553 = vld [vmem:[#allocation4 + $0x7c8] sm:$0xff]
        %v554 = vld [vmem:[#allocation4 + $0x7d0] sm:$0xff]
        %v555 = vld [vmem:[#allocation4 + $0x7d8] sm:$0xff]
        %v556 = vld [vmem:[#allocation4 + $0x7e0] sm:$0xff]
        %v557 = vld [vmem:[#allocation4 + $0x7e8] sm:$0xff]
        %v558 = vld [vmem:[#allocation4 + $0x7f0] sm:$0xff]
        %v559 = vld [vmem:[#allocation4 + $0x7f8] sm:$0xff]
        %v560 = vld [vmem:[#allocation4 + $0x800] sm:$0xff]
        %v561 = vld [vmem:[#allocation4 + $0x808] sm:$0xff]
        %v562 = vld [vmem:[#allocation4 + $0x810] sm:$0xff]
        %v563 = vld [vmem:[#allocation4 + $0x818] sm:$0xff]
        %v564 = vld [vmem:[#allocation4 + $0x820] sm:$0xff]
        %v565 = vld [vmem:[#allocation4 + $0x828] sm:$0xff]
        %v566 = vld [vmem:[#allocation4 + $0x830] sm:$0xff]
        %v567 = vld [vmem:[#allocation4 + $0x838] sm:$0xff]
        %v568 = vld [vmem:[#allocation4 + $0x840] sm:$0xff]
        %v569 = vld [vmem:[#allocation4 + $0x848] sm:$0xff]
        %v570 = vld [vmem:[#allocation4 + $0x850] sm:$0xff]
        %v571 = vld [vmem:[#allocation4 + $0x858] sm:$0xff]
        %v572 = vld [vmem:[#allocation4 + $0x860] sm:$0xff]
        %v573 = vld [vmem:[#allocation4 + $0x868] sm:$0xff]
        %v574 = vld [vmem:[#allocation4 + $0x870] sm:$0xff]
        %v575 = vld [vmem:[#allocation4 + $0x878] sm:$0xff]
        %v576 = vld [vmem:[#allocation4 + $0x880] sm:$0xff]
        %v577 = vld [vmem:[#allocation4 + $0x888] sm:$0xff]
        %v578 = vld [vmem:[#allocation4 + $0x890] sm:$0xff]
        %v579 = vld [vmem:[#allocation4 + $0x898] sm:$0xff]
        %v580 = vld [vmem:[#allocation4 + $0x8a0] sm:$0xff]
        %v581 = vld [vmem:[#allocation4 + $0x8a8] sm:$0xff]
        %v582 = vld [vmem:[#allocation4 + $0x8b0] sm:$0xff]
        %v583 = vld [vmem:[#allocation4 + $0x8b8] sm:$0xff]
        %v584 = vld [vmem:[#allocation4 + $0x8c0] sm:$0xff]
        %v585 = vld [vmem:[#allocation4 + $0x8c8] sm:$0xff]
        %v586 = vld [vmem:[#allocation4 + $0x8d0] sm:$0xff]
        %v587 = vld [vmem:[#allocation4 + $0x8d8] sm:$0xff]
        %v588 = vld [vmem:[#allocation4 + $0x8e0] sm:$0xff]
        %v589 = vld [vmem:[#allocation4 + $0x8e8] sm:$0xff]
        %v590 = vld [vmem:[#allocation4 + $0x8f0] sm:$0xff]
        %v591 = vld [vmem:[#allocation4 + $0x8f8] sm:$0xff]
        %v592 = vld [vmem:[#allocation4 + $0x900] sm:$0xff]
        %v593 = vld [vmem:[#allocation4 + $0x908] sm:$0xff]
        %v594 = vld [vmem:[#allocation4 + $0x910] sm:$0xff]
        %v595 = vld [vmem:[#allocation4 + $0x918] sm:$0xff]
        %v596 = vld [vmem:[#allocation4 + $0x920] sm:$0xff]
        %v597 = vld [vmem:[#allocation4 + $0x928] sm:$0xff]
        %v598 = vld [vmem:[#allocation4 + $0x930] sm:$0xff]
        %v599 = vld [vmem:[#allocation4 + $0x938] sm:$0xff]
        %v600 = vld [vmem:[#allocation4 + $0x940] sm:$0xff]
        %v601 = vld [vmem:[#allocation4 + $0x948] sm:$0xff]
        %v602 = vld [vmem:[#allocation4 + $0x950] sm:$0xff]
        %v603 = vld [vmem:[#allocation4 + $0x958] sm:$0xff]
        %v604 = vld [vmem:[#allocation4 + $0x960] sm:$0xff]
        %v605 = vld [vmem:[#allocation4 + $0x968] sm:$0xff]
        %v606 = vld [vmem:[#allocation4 + $0x970] sm:$0xff]
        %v607 = vld [vmem:[#allocation4 + $0x978] sm:$0xff]
        %v608 = vld [vmem:[#allocation4 + $0x980] sm:$0xff]
        %v609 = vld [vmem:[#allocation4 + $0x988] sm:$0xff]
        %v610 = vld [vmem:[#allocation4 + $0x990] sm:$0xff]
        %v611 = vld [vmem:[#allocation4 + $0x998] sm:$0xff]
        %v612 = vld [vmem:[#allocation4 + $0x9a0] sm:$0xff]
        %v613 = vld [vmem:[#allocation4 + $0x9a8] sm:$0xff]
        %v614 = vld [vmem:[#allocation4 + $0x9b0] sm:$0xff]
        %v615 = vld [vmem:[#allocation4 + $0x9b8] sm:$0xff]
        %v616 = vld [vmem:[#allocation4 + $0x9c0] sm:$0xff]
        %v617 = vld [vmem:[#allocation4 + $0x9c8] sm:$0xff]
        %v618 = vld [vmem:[#allocation4 + $0x9d0] sm:$0xff]
        %v619 = vld [vmem:[#allocation4 + $0x9d8] sm:$0xff]
        %v620 = vld [vmem:[#allocation4 + $0x9e0] sm:$0xff]
        %v621 = vld [vmem:[#allocation4 + $0x9e8] sm:$0xff]
        %v622 = vld [vmem:[#allocation4 + $0x9f0] sm:$0xff]
        %v623 = vld [vmem:[#allocation4 + $0x9f8] sm:$0xff]
        %v624 = vld [vmem:[#allocation4 + $0xa00] sm:$0xff]
        %v625 = vld [vmem:[#allocation4 + $0xa08] sm:$0xff]
        %v626 = vld [vmem:[#allocation4 + $0xa10] sm:$0xff]
        %v627 = vld [vmem:[#allocation4 + $0xa18] sm:$0xff]
        %v628 = vld [vmem:[#allocation4 + $0xa20] sm:$0xff]
        %v629 = vld [vmem:[#allocation4 + $0xa28] sm:$0xff]
        %v630 = vld [vmem:[#allocation4 + $0xa30] sm:$0xff]
        %v631 = vld [vmem:[#allocation4 + $0xa38] sm:$0xff]
        %v632 = vld [vmem:[#allocation4 + $0xa40] sm:$0xff]
        %v633 = vld [vmem:[#allocation4 + $0xa48] sm:$0xff]
        %v634 = vld [vmem:[#allocation4 + $0xa50] sm:$0xff]
        %v635 = vld [vmem:[#allocation4 + $0xa58] sm:$0xff]
        %v636 = vld [vmem:[#allocation4 + $0xa60] sm:$0xff]
        %v637 = vld [vmem:[#allocation4 + $0xa68] sm:$0xff]
        %v638 = vld [vmem:[#allocation4 + $0xa70] sm:$0xff]
        %v639 = vld [vmem:[#allocation4 + $0xa78] sm:$0xff]
        %v640 = vld [vmem:[#allocation4 + $0xa80] sm:$0xff]
        %v641 = vld [vmem:[#allocation4 + $0xa88] sm:$0xff]
        %v642 = vld [vmem:[#allocation4 + $0xa90] sm:$0xff]
        %v643 = vld [vmem:[#allocation4 + $0xa98] sm:$0xff]
        %v644 = vld [vmem:[#allocation4 + $0xaa0] sm:$0xff]
        %v645 = vld [vmem:[#allocation4 + $0xaa8] sm:$0xff]
        %v646 = vld [vmem:[#allocation4 + $0xab0] sm:$0xff]
        %v647 = vld [vmem:[#allocation4 + $0xab8] sm:$0xff]
        %v648 = vld [vmem:[#allocation4 + $0xac0] sm:$0xff]
        %v649 = vld [vmem:[#allocation4 + $0xac8] sm:$0xff]
        %v650 = vld [vmem:[#allocation4 + $0xad0] sm:$0xff]
        %v651 = vld [vmem:[#allocation4 + $0xad8] sm:$0xff]
        %v652 = vld [vmem:[#allocation4 + $0xae0] sm:$0xff]
        %v653 = vld [vmem:[#allocation4 + $0xae8] sm:$0xff]
        %v654 = vld [vmem:[#allocation4 + $0xaf0] sm:$0xff]
        %v655 = vld [vmem:[#allocation4 + $0xaf8] sm:$0xff]
        %v656 = vld [vmem:[#allocation4 + $0xb00] sm:$0xff]
        %v657 = vld [vmem:[#allocation4 + $0xb08] sm:$0xff]
        %v658 = vld [vmem:[#allocation4 + $0xb10] sm:$0xff]
        %v659 = vld [vmem:[#allocation4 + $0xb18] sm:$0xff]
        %v660 = vld [vmem:[#allocation4 + $0xb20] sm:$0xff]
        %v661 = vld [vmem:[#allocation4 + $0xb28] sm:$0xff]
        %v662 = vld [vmem:[#allocation4 + $0xb30] sm:$0xff]
        %v663 = vld [vmem:[#allocation4 + $0xb38] sm:$0xff]
        %v664 = vld [vmem:[#allocation4 + $0xb40] sm:$0xff]
        %v665 = vld [vmem:[#allocation4 + $0xb48] sm:$0xff]
        %v666 = vld [vmem:[#allocation4 + $0xb50] sm:$0xff]
        %v667 = vld [vmem:[#allocation4 + $0xb58] sm:$0xff]
        %v668 = vld [vmem:[#allocation4 + $0xb60] sm:$0xff]
        %v669 = vld [vmem:[#allocation4 + $0xb68] sm:$0xff]
        %v670 = vld [vmem:[#allocation4 + $0xb70] sm:$0xff]
        %v671 = vld [vmem:[#allocation4 + $0xb78] sm:$0xff]
        %v672 = vld [vmem:[#allocation4 + $0xb80] sm:$0xff]
        %v673 = vld [vmem:[#allocation4 + $0xb88] sm:$0xff]
        %v674 = vld [vmem:[#allocation4 + $0xb90] sm:$0xff]
        %v675 = vld [vmem:[#allocation4 + $0xb98] sm:$0xff]
        %v676 = vld [vmem:[#allocation4 + $0xba0] sm:$0xff]
        %v677 = vld [vmem:[#allocation4 + $0xba8] sm:$0xff]
        %v678 = vld [vmem:[#allocation4 + $0xbb0] sm:$0xff]
        %v679 = vld [vmem:[#allocation4 + $0xbb8] sm:$0xff]
        %v680 = vld [vmem:[#allocation4 + $0xbc0] sm:$0xff]
        %v681 = vld [vmem:[#allocation4 + $0xbc8] sm:$0xff]
        %v682 = vld [vmem:[#allocation4 + $0xbd0] sm:$0xff]
        %v683 = vld [vmem:[#allocation4 + $0xbd8] sm:$0xff]
        %v684 = vld [vmem:[#allocation4 + $0xbe0] sm:$0xff]
        %v685 = vld [vmem:[#allocation4 + $0xbe8] sm:$0xff]
        %v686 = vld [vmem:[#allocation4 + $0xbf0] sm:$0xff]
        %v687 = vld [vmem:[#allocation4 + $0xbf8] sm:$0xff]
        %v688 = vld [vmem:[#allocation4 + $0xc00] sm:$0xff]
        %v689 = vld [vmem:[#allocation4 + $0xc08] sm:$0xff]
        %v690 = vld [vmem:[#allocation4 + $0xc10] sm:$0xff]
        %v691 = vld [vmem:[#allocation4 + $0xc18] sm:$0xff]
        %v692 = vld [vmem:[#allocation4 + $0xc20] sm:$0xff]
        %v693 = vld [vmem:[#allocation4 + $0xc28] sm:$0xff]
        %v694 = vld [vmem:[#allocation4 + $0xc30] sm:$0xff]
        %v695 = vld [vmem:[#allocation4 + $0xc38] sm:$0xff]
        %v696 = vld [vmem:[#allocation4 + $0xc40] sm:$0xff]
        %v697 = vld [vmem:[#allocation4 + $0xc48] sm:$0xff]
        %v698 = vld [vmem:[#allocation4 + $0xc50] sm:$0xff]
        %v699 = vld [vmem:[#allocation4 + $0xc58] sm:$0xff]
        %v700 = vld [vmem:[#allocation4 + $0xc60] sm:$0xff]
        %v701 = vld [vmem:[#allocation4 + $0xc68] sm:$0xff]
        %v702 = vld [vmem:[#allocation4 + $0xc70] sm:$0xff]
        %v703 = vld [vmem:[#allocation4 + $0xc78] sm:$0xff]
        %v704 = vld [vmem:[#allocation4 + $0xc80] sm:$0xff]
        %v705 = vld [vmem:[#allocation4 + $0xc88] sm:$0xff]
        %v706 = vld [vmem:[#allocation4 + $0xc90] sm:$0xff]
        %v707 = vld [vmem:[#allocation4 + $0xc98] sm:$0xff]
        %v708 = vld [vmem:[#allocation4 + $0xca0] sm:$0xff]
        %v709 = vld [vmem:[#allocation4 + $0xca8] sm:$0xff]
        %v710 = vld [vmem:[#allocation4 + $0xcb0] sm:$0xff]
        %v711 = vld [vmem:[#allocation4 + $0xcb8] sm:$0xff]
        %v712 = vld [vmem:[#allocation4 + $0xcc0] sm:$0xff]
        %v713 = vld [vmem:[#allocation4 + $0xcc8] sm:$0xff]
        %v714 = vld [vmem:[#allocation4 + $0xcd0] sm:$0xff]
        %v715 = vld [vmem:[#allocation4 + $0xcd8] sm:$0xff]
        %v716 = vld [vmem:[#allocation4 + $0xce0] sm:$0xff]
        %v717 = vld [vmem:[#allocation4 + $0xce8] sm:$0xff]
        %v718 = vld [vmem:[#allocation4 + $0xcf0] sm:$0xff]
        %v719 = vld [vmem:[#allocation4 + $0xcf8] sm:$0xff]
        %v720 = vld [vmem:[#allocation4 + $0xd00] sm:$0xff]
        %v721 = vld [vmem:[#allocation4 + $0xd08] sm:$0xff]
        %v722 = vld [vmem:[#allocation4 + $0xd10] sm:$0xff]
        %v723 = vld [vmem:[#allocation4 + $0xd18] sm:$0xff]
        %v724 = vld [vmem:[#allocation4 + $0xd20] sm:$0xff]
        %v725 = vld [vmem:[#allocation4 + $0xd28] sm:$0xff]
        %v726 = vld [vmem:[#allocation4 + $0xd30] sm:$0xff]
        %v727 = vld [vmem:[#allocation4 + $0xd38] sm:$0xff]
        %v728 = vld [vmem:[#allocation4 + $0xd40] sm:$0xff]
        %v729 = vld [vmem:[#allocation4 + $0xd48] sm:$0xff]
        %v730 = vld [vmem:[#allocation4 + $0xd50] sm:$0xff]
        %v731 = vld [vmem:[#allocation4 + $0xd58] sm:$0xff]
        %v732 = vld [vmem:[#allocation4 + $0xd60] sm:$0xff]
        %v733 = vld [vmem:[#allocation4 + $0xd68] sm:$0xff]
        %v734 = vld [vmem:[#allocation4 + $0xd70] sm:$0xff]
        %v735 = vld [vmem:[#allocation4 + $0xd78] sm:$0xff]
        %v736 = vld [vmem:[#allocation4 + $0xd80] sm:$0xff]
        %v737 = vld [vmem:[#allocation4 + $0xd88] sm:$0xff]
        %v738 = vld [vmem:[#allocation4 + $0xd90] sm:$0xff]
        %v739 = vld [vmem:[#allocation4 + $0xd98] sm:$0xff]
        %v740 = vld [vmem:[#allocation4 + $0xda0] sm:$0xff]
        %v741 = vld [vmem:[#allocation4 + $0xda8] sm:$0xff]
        %v742 = vld [vmem:[#allocation4 + $0xdb0] sm:$0xff]
        %v743 = vld [vmem:[#allocation4 + $0xdb8] sm:$0xff]
        %v744 = vld [vmem:[#allocation4 + $0xdc0] sm:$0xff]
        %v745 = vld [vmem:[#allocation4 + $0xdc8] sm:$0xff]
        %v746 = vld [vmem:[#allocation4 + $0xdd0] sm:$0xff]
        %v747 = vld [vmem:[#allocation4 + $0xdd8] sm:$0xff]
        %v748 = vld [vmem:[#allocation4 + $0xde0] sm:$0xff]
        %v749 = vld [vmem:[#allocation4 + $0xde8] sm:$0xff]
        %v750 = vld [vmem:[#allocation4 + $0xdf0] sm:$0xff]
        %v751 = vld [vmem:[#allocation4 + $0xdf8] sm:$0xff]
        %v752 = vld [vmem:[#allocation4 + $0xe00] sm:$0xff]
        %v753 = vld [vmem:[#allocation4 + $0xe08] sm:$0xff]
        %v754 = vld [vmem:[#allocation4 + $0xe10] sm:$0xff]
        %v755 = vld [vmem:[#allocation4 + $0xe18] sm:$0xff]
        %v756 = vld [vmem:[#allocation4 + $0xe20] sm:$0xff]
        %v757 = vld [vmem:[#allocation4 + $0xe28] sm:$0xff]
        %v758 = vld [vmem:[#allocation4 + $0xe30] sm:$0xff]
        %v759 = vld [vmem:[#allocation4 + $0xe38] sm:$0xff]
        %v760 = vld [vmem:[#allocation4 + $0xe40] sm:$0xff]
        %v761 = vld [vmem:[#allocation4 + $0xe48] sm:$0xff]
        %v762 = vld [vmem:[#allocation4 + $0xe50] sm:$0xff]
        %v763 = vld [vmem:[#allocation4 + $0xe58] sm:$0xff]
        %v764 = vld [vmem:[#allocation4 + $0xe60] sm:$0xff]
        %v765 = vld [vmem:[#allocation4 + $0xe68] sm:$0xff]
        %v766 = vld [vmem:[#allocation4 + $0xe70] sm:$0xff]
        %v767 = vld [vmem:[#allocation4 + $0xe78] sm:$0xff]
        %v768 = vld [vmem:[#allocation4 + $0xe80] sm:$0xff]
        %v769 = vld [vmem:[#allocation4 + $0xe88] sm:$0xff]
        %v770 = vld [vmem:[#allocation4 + $0xe90] sm:$0xff]
        %v771 = vld [vmem:[#allocation4 + $0xe98] sm:$0xff]
        %v772 = vld [vmem:[#allocation4 + $0xea0] sm:$0xff]
        %v773 = vld [vmem:[#allocation4 + $0xea8] sm:$0xff]
        %v774 = vld [vmem:[#allocation4 + $0xeb0] sm:$0xff]
        %v775 = vld [vmem:[#allocation4 + $0xeb8] sm:$0xff]
        %v776 = vld [vmem:[#allocation4 + $0xec0] sm:$0xff]
        %v777 = vld [vmem:[#allocation4 + $0xec8] sm:$0xff]
        %v778 = vld [vmem:[#allocation4 + $0xed0] sm:$0xff]
        %v779 = vld [vmem:[#allocation4 + $0xed8] sm:$0xff]
        %v780 = vld [vmem:[#allocation4 + $0xee0] sm:$0xff]
        %v781 = vld [vmem:[#allocation4 + $0xee8] sm:$0xff]
        %v782 = vld [vmem:[#allocation4 + $0xef0] sm:$0xff]
        %v783 = vld [vmem:[#allocation4 + $0xef8] sm:$0xff]
        %v784 = vld [vmem:[#allocation4 + $0xf00] sm:$0xff]
        %v785 = vld [vmem:[#allocation4 + $0xf08] sm:$0xff]
        %v786 = vld [vmem:[#allocation4 + $0xf10] sm:$0xff]
        %v787 = vld [vmem:[#allocation4 + $0xf18] sm:$0xff]
        %v788 = vld [vmem:[#allocation4 + $0xf20] sm:$0xff]
        %v789 = vld [vmem:[#allocation4 + $0xf28] sm:$0xff]
        %v790 = vld [vmem:[#allocation4 + $0xf30] sm:$0xff]
        %v791 = vld [vmem:[#allocation4 + $0xf38] sm:$0xff]
        %v792 = vld [vmem:[#allocation4 + $0xf40] sm:$0xff]
        %v793 = vld [vmem:[#allocation4 + $0xf48] sm:$0xff]
        %v794 = vld [vmem:[#allocation4 + $0xf50] sm:$0xff]
        %v795 = vld [vmem:[#allocation4 + $0xf58] sm:$0xff]
        %v796 = vld [vmem:[#allocation4 + $0xf60] sm:$0xff]
        %v797 = vld [vmem:[#allocation4 + $0xf68] sm:$0xff]
        %v798 = vld [vmem:[#allocation4 + $0xf70] sm:$0xff]
        %v799 = vld [vmem:[#allocation4 + $0xf78] sm:$0xff]
        %v800 = vld [vmem:[#allocation4 + $0xf80] sm:$0xff]
        %v801 = vld [vmem:[#allocation4 + $0xf88] sm:$0xff]
        %v802 = vld [vmem:[#allocation4 + $0xf90] sm:$0xff]
        %v803 = vld [vmem:[#allocation4 + $0xf98] sm:$0xff]
        %v804 = vld [vmem:[#allocation4 + $0xfa0] sm:$0xff]
        %v805 = vld [vmem:[#allocation4 + $0xfa8] sm:$0xff]
        %v806 = vld [vmem:[#allocation4 + $0xfb0] sm:$0xff]
        %v807 = vld [vmem:[#allocation4 + $0xfb8] sm:$0xff]
        %v808 = vld [vmem:[#allocation4 + $0xfc0] sm:$0xff]
        %v809 = vld [vmem:[#allocation4 + $0xfc8] sm:$0xff]
        %v810 = vld [vmem:[#allocation4 + $0xfd0] sm:$0xff]
        %v811 = vld [vmem:[#allocation4 + $0xfd8] sm:$0xff]
        %v812 = vld [vmem:[#allocation4 + $0xfe0] sm:$0xff]
        %v813 = vld [vmem:[#allocation4 + $0xfe8] sm:$0xff]
        %v814 = vld [vmem:[#allocation4 + $0xff0] sm:$0xff]
        %v815 = vld [vmem:[#allocation4 + $0xff8] sm:$0xff]
        %v816 = vld [vmem:[#allocation6] sm:$0xff]
        %v817 = vld [vmem:[#allocation6 + $0x8] sm:$0xff]
        %v820 = vlaneseq
        %v821 = vshrl.u32 %v820, 7
        %v822 = vsub.s32 0, %v821
        %v823 = vrot.slane %v816, %v822
        %v824 = vlaneseq
        %v825 = vshrl.u32 %v824, 7
        %v826 = vsub.s32 1, %v825
        %v827 = vrot.slane %v816, %v826
        %v828 = vlaneseq
        %v829 = vshrl.u32 %v828, 7
        %v830 = vsub.s32 2, %v829
        %v831 = vrot.slane %v816, %v830
        %v832 = vlaneseq
        %v833 = vshrl.u32 %v832, 7
        %v834 = vsub.s32 3, %v833
        %v835 = vrot.slane %v816, %v834
        %v836 = vlaneseq
        %v837 = vshrl.u32 %v836, 7
        %v838 = vsub.s32 4, %v837
        %v839 = vrot.slane %v816, %v838
        %v840 = vlaneseq
        %v841 = vshrl.u32 %v840, 7
        %v842 = vsub.s32 5, %v841
        %v843 = vrot.slane %v816, %v842
        %v844 = vlaneseq
        %v845 = vshrl.u32 %v844, 7
        %v846 = vsub.s32 6, %v845
        %v847 = vrot.slane %v816, %v846
        %v848 = vlaneseq
        %v849 = vshrl.u32 %v848, 7
        %v850 = vsub.s32 7, %v849
        %v851 = vrot.slane %v816, %v850
        %v852 = vlaneseq
        %v853 = vshrl.u32 %v852, 7
        %v854 = vsub.s32 0, %v853
        %v855 = vrot.slane %v817, %v854
        %v856 = vlaneseq
        %v857 = vshrl.u32 %v856, 7
        %v858 = vsub.s32 1, %v857
        %v859 = vrot.slane %v817, %v858
        %v860 = vlaneseq
        %v861 = vshrl.u32 %v860, 7
        %v862 = vsub.s32 2, %v861
        %v863 = vrot.slane %v817, %v862
        %v864 = vlaneseq
        %v865 = vshrl.u32 %v864, 7
        %v866 = vsub.s32 3, %v865
        %v867 = vrot.slane %v817, %v866
        %v868 = vlaneseq
        %v869 = vshrl.u32 %v868, 7
        %v870 = vsub.s32 4, %v869
        %v871 = vrot.slane %v817, %v870
        %v872 = vlaneseq
        %v873 = vshrl.u32 %v872, 7
        %v874 = vsub.s32 5, %v873
        %v875 = vrot.slane %v817, %v874
        %v876 = vlaneseq
        %v877 = vshrl.u32 %v876, 7
        %v878 = vsub.s32 6, %v877
        %v879 = vrot.slane %v817, %v878
        %v880 = vlaneseq
        %v881 = vshrl.u32 %v880, 7
        %v882 = vsub.s32 7, %v881
        %v883 = vrot.slane %v817, %v882
        %900 = vmatprep.subr.mxu0 %v305
        %901 = vmatpush1.msra.mxu0 %v304
        %902 = vmatprep.subr.mxu0 %v321
        %903 = vmatpush1.msra.mxu0 %v320
        %904 = vmatprep.subr.mxu0 %v337
        %905 = vmatpush1.msra.mxu0 %v336
        %906 = vmatprep.subr.mxu0 %v353
        %907 = vmatpush1.msra.mxu0 %v352
        %908 = vmatprep.subr.mxu0 %v369
        %909 = vmatpush1.msra.mxu0 %v368
        %910 = vmatprep.subr.mxu0 %v385
        %911 = vmatpush1.msra.mxu0 %v384
        %912 = vmatprep.subr.mxu0 %v401
        %913 = vmatpush1.msra.mxu0 %v400
        %914 = vmatprep.subr.mxu0 %v417
        %915 = vmatpush1.msra.mxu0 %v416
        %916 = vmatprep.subr.mxu0 %v433
        %917 = vmatpush1.msra.mxu0 %v432
        %918 = vmatprep.subr.mxu0 %v449
        %919 = vmatpush1.msra.mxu0 %v448
        %920 = vmatprep.subr.mxu0 %v465
        %921 = vmatpush1.msra.mxu0 %v464
        %922 = vmatprep.subr.mxu0 %v481
        %923 = vmatpush1.msra.mxu0 %v480
        %924 = vmatprep.subr.mxu0 %v497
        %925 = vmatpush1.msra.mxu0 %v496
        %926 = vmatprep.subr.mxu0 %v513
        %927 = vmatpush1.msra.mxu0 %v512
        %928 = vmatprep.subr.mxu0 %v529
        %929 = vmatpush1.msra.mxu0 %v528
        %930 = vmatprep.subr.mxu0 %v545
        %931 = vmatpush1.msra.mxu0 %v544
        %932 = vmatprep.subr.mxu0 %v561
        %933 = vmatpush1.msra.mxu0 %v560
        %934 = vmatprep.subr.mxu0 %v577
        %935 = vmatpush1.msra.mxu0 %v576
        %936 = vmatprep.subr.mxu0 %v593
        %937 = vmatpush1.msra.mxu0 %v592
        %938 = vmatprep.subr.mxu0 %v609
        %939 = vmatpush1.msra.mxu0 %v608
        %940 = vmatprep.subr.mxu0 %v625
        %941 = vmatpush1.msra.mxu0 %v624
        %942 = vmatprep.subr.mxu0 %v641
        %943 = vmatpush1.msra.mxu0 %v640
        %944 = vmatprep.subr.mxu0 %v657
        %945 = vmatpush1.msra.mxu0 %v656
        %946 = vmatprep.subr.mxu0 %v673
        %947 = vmatpush1.msra.mxu0 %v672
        %948 = vmatprep.subr.mxu0 %v689
        %949 = vmatpush1.msra.mxu0 %v688
        %950 = vmatprep.subr.mxu0 %v705
        %951 = vmatpush1.msra.mxu0 %v704
        %952 = vmatprep.subr.mxu0 %v721
        %953 = vmatpush1.msra.mxu0 %v720
        %954 = vmatprep.subr.mxu0 %v737
        %955 = vmatpush1.msra.mxu0 %v736
        %956 = vmatprep.subr.mxu0 %v753
        %957 = vmatpush1.msra.mxu0 %v752
        %958 = vmatprep.subr.mxu0 %v769
        %959 = vmatpush1.msra.mxu0 %v768
        %960 = vmatprep.subr.mxu0 %v785
        %961 = vmatpush1.msra.mxu0 %v784
        %962 = vmatprep.subr.mxu0 %v801
        %963 = vmatpush1.msra.mxu0 %v800
        %964 = vmatprep.mubr.f32.mxu0 %v303
        %965 = vmatmul.mubr.f32.gmra.mrb[0].mxu0 %v302
        %v966 = vpop.f32.mrb[0].mxu0
        %v967 = vadd.f32 %v823, %v966
        %v968 = vpop.f32.mrb[0].mxu0
        %v969 = vadd.f32 %v827, %v968
        %970 = vdwg.mxu0
        %971 = vmatprep.subr.mxu0 %v307
        %972 = vmatpush1.msra.mxu0 %v306
        %973 = vmatprep.subr.mxu0 %v323
        %974 = vmatpush1.msra.mxu0 %v322
        %975 = vmatprep.subr.mxu0 %v339
        %976 = vmatpush1.msra.mxu0 %v338
        %977 = vmatprep.subr.mxu0 %v355
        %978 = vmatpush1.msra.mxu0 %v354
        %979 = vmatprep.subr.mxu0 %v371
        %980 = vmatpush1.msra.mxu0 %v370
        %981 = vmatprep.subr.mxu0 %v387
        %982 = vmatpush1.msra.mxu0 %v386
        %983 = vmatprep.subr.mxu0 %v403
        %984 = vmatpush1.msra.mxu0 %v402
        %985 = vmatprep.subr.mxu0 %v419
        %986 = vmatpush1.msra.mxu0 %v418
        %987 = vmatprep.subr.mxu0 %v435
        %988 = vmatpush1.msra.mxu0 %v434
        %989 = vmatprep.subr.mxu0 %v451
        %990 = vmatpush1.msra.mxu0 %v450
        %991 = vmatprep.subr.mxu0 %v467
        %992 = vmatpush1.msra.mxu0 %v466
        %993 = vmatprep.subr.mxu0 %v483
        %994 = vmatpush1.msra.mxu0 %v482
        %995 = vmatprep.subr.mxu0 %v499
        %996 = vmatpush1.msra.mxu0 %v498
        %997 = vmatprep.subr.mxu0 %v515
        %998 = vmatpush1.msra.mxu0 %v514
        %999 = vmatprep.subr.mxu0 %v531
        %1000 = vmatpush1.msra.mxu0 %v530
        %1001 = vmatprep.subr.mxu0 %v547
        %1002 = vmatpush1.msra.mxu0 %v546
        %1003 = vmatprep.subr.mxu0 %v563
        %1004 = vmatpush1.msra.mxu0 %v562
        %1005 = vmatprep.subr.mxu0 %v579
        %1006 = vmatpush1.msra.mxu0 %v578
        %1007 = vmatprep.subr.mxu0 %v595
        %1008 = vmatpush1.msra.mxu0 %v594
        %1009 = vmatprep.subr.mxu0 %v611
        %1010 = vmatpush1.msra.mxu0 %v610
        %1011 = vmatprep.subr.mxu0 %v627
        %1012 = vmatpush1.msra.mxu0 %v626
        %1013 = vmatprep.subr.mxu0 %v643
        %1014 = vmatpush1.msra.mxu0 %v642
        %1015 = vmatprep.subr.mxu0 %v659
        %1016 = vmatpush1.msra.mxu0 %v658
        %1017 = vmatprep.subr.mxu0 %v675
        %1018 = vmatpush1.msra.mxu0 %v674
        %1019 = vmatprep.subr.mxu0 %v691
        %1020 = vmatpush1.msra.mxu0 %v690
        %1021 = vmatprep.subr.mxu0 %v707
        %1022 = vmatpush1.msra.mxu0 %v706
        %1023 = vmatprep.subr.mxu0 %v723
        %1024 = vmatpush1.msra.mxu0 %v722
        %1025 = vmatprep.subr.mxu0 %v739
        %1026 = vmatpush1.msra.mxu0 %v738
        %1027 = vmatprep.subr.mxu0 %v755
        %1028 = vmatpush1.msra.mxu0 %v754
        %1029 = vmatprep.subr.mxu0 %v771
        %1030 = vmatpush1.msra.mxu0 %v770
        %1031 = vmatprep.subr.mxu0 %v787
        %1032 = vmatpush1.msra.mxu0 %v786
        %1033 = vmatprep.subr.mxu0 %v803
        %1034 = vmatpush1.msra.mxu0 %v802
        %1035 = vmatprep.mubr.f32.mxu0 %v303
        %1036 = vmatmul.mubr.f32.gmra.mrb[0].mxu0 %v302
        %v1037 = vpop.f32.mrb[0].mxu0
        %v1038 = vadd.f32 %v831, %v1037
        %v1039 = vpop.f32.mrb[0].mxu0
        %v1040 = vadd.f32 %v835, %v1039
        %1041 = vdwg.mxu0
        %1042 = vmatprep.subr.mxu0 %v309
        %1043 = vmatpush1.msra.mxu0 %v308
        %1044 = vmatprep.subr.mxu0 %v325
        %1045 = vmatpush1.msra.mxu0 %v324
        %1046 = vmatprep.subr.mxu0 %v341
        %1047 = vmatpush1.msra.mxu0 %v340
        %1048 = vmatprep.subr.mxu0 %v357
        %1049 = vmatpush1.msra.mxu0 %v356
        %1050 = vmatprep.subr.mxu0 %v373
        %1051 = vmatpush1.msra.mxu0 %v372
        %1052 = vmatprep.subr.mxu0 %v389
        %1053 = vmatpush1.msra.mxu0 %v388
        %1054 = vmatprep.subr.mxu0 %v405
        %1055 = vmatpush1.msra.mxu0 %v404
        %1056 = vmatprep.subr.mxu0 %v421
        %1057 = vmatpush1.msra.mxu0 %v420
        %1058 = vmatprep.subr.mxu0 %v437
        %1059 = vmatpush1.msra.mxu0 %v436
        %1060 = vmatprep.subr.mxu0 %v453
        %1061 = vmatpush1.msra.mxu0 %v452
        %1062 = vmatprep.subr.mxu0 %v469
        %1063 = vmatpush1.msra.mxu0 %v468
        %1064 = vmatprep.subr.mxu0 %v485
        %1065 = vmatpush1.msra.mxu0 %v484
        %1066 = vmatprep.subr.mxu0 %v501
        %1067 = vmatpush1.msra.mxu0 %v500
        %1068 = vmatprep.subr.mxu0 %v517
        %1069 = vmatpush1.msra.mxu0 %v516
        %1070 = vmatprep.subr.mxu0 %v533
        %1071 = vmatpush1.msra.mxu0 %v532
        %1072 = vmatprep.subr.mxu0 %v549
        %1073 = vmatpush1.msra.mxu0 %v548
        %1074 = vmatprep.subr.mxu0 %v565
        %1075 = vmatpush1.msra.mxu0 %v564
        %1076 = vmatprep.subr.mxu0 %v581
        %1077 = vmatpush1.msra.mxu0 %v580
        %1078 = vmatprep.subr.mxu0 %v597
        %1079 = vmatpush1.msra.mxu0 %v596
        %1080 = vmatprep.subr.mxu0 %v613
        %1081 = vmatpush1.msra.mxu0 %v612
        %1082 = vmatprep.subr.mxu0 %v629
        %1083 = vmatpush1.msra.mxu0 %v628
        %1084 = vmatprep.subr.mxu0 %v645
        %1085 = vmatpush1.msra.mxu0 %v644
        %1086 = vmatprep.subr.mxu0 %v661
        %1087 = vmatpush1.msra.mxu0 %v660
        %1088 = vmatprep.subr.mxu0 %v677
        %1089 = vmatpush1.msra.mxu0 %v676
        %1090 = vmatprep.subr.mxu0 %v693
        %1091 = vmatpush1.msra.mxu0 %v692
        %1092 = vmatprep.subr.mxu0 %v709
        %1093 = vmatpush1.msra.mxu0 %v708
        %1094 = vmatprep.subr.mxu0 %v725
        %1095 = vmatpush1.msra.mxu0 %v724
        %1096 = vmatprep.subr.mxu0 %v741
        %1097 = vmatpush1.msra.mxu0 %v740
        %1098 = vmatprep.subr.mxu0 %v757
        %1099 = vmatpush1.msra.mxu0 %v756
        %1100 = vmatprep.subr.mxu0 %v773
        %1101 = vmatpush1.msra.mxu0 %v772
        %1102 = vmatprep.subr.mxu0 %v789
        %1103 = vmatpush1.msra.mxu0 %v788
        %1104 = vmatprep.subr.mxu0 %v805
        %1105 = vmatpush1.msra.mxu0 %v804
        %1106 = vmatprep.mubr.f32.mxu0 %v303
        %1107 = vmatmul.mubr.f32.gmra.mrb[0].mxu0 %v302
        %v1108 = vpop.f32.mrb[0].mxu0
        %v1109 = vadd.f32 %v839, %v1108
        %v1110 = vpop.f32.mrb[0].mxu0
        %v1111 = vadd.f32 %v843, %v1110
        %1112 = vdwg.mxu0
        %1113 = vmatprep.subr.mxu0 %v311
        %1114 = vmatpush1.msra.mxu0 %v310
        %1115 = vmatprep.subr.mxu0 %v327
        %1116 = vmatpush1.msra.mxu0 %v326
        %1117 = vmatprep.subr.mxu0 %v343
        %1118 = vmatpush1.msra.mxu0 %v342
        %1119 = vmatprep.subr.mxu0 %v359
        %1120 = vmatpush1.msra.mxu0 %v358
        %1121 = vmatprep.subr.mxu0 %v375
        %1122 = vmatpush1.msra.mxu0 %v374
        %1123 = vmatprep.subr.mxu0 %v391
        %1124 = vmatpush1.msra.mxu0 %v390
        %1125 = vmatprep.subr.mxu0 %v407
        %1126 = vmatpush1.msra.mxu0 %v406
        %1127 = vmatprep.subr.mxu0 %v423
        %1128 = vmatpush1.msra.mxu0 %v422
        %1129 = vmatprep.subr.mxu0 %v439
        %1130 = vmatpush1.msra.mxu0 %v438
        %1131 = vmatprep.subr.mxu0 %v455
        %1132 = vmatpush1.msra.mxu0 %v454
        %1133 = vmatprep.subr.mxu0 %v471
        %1134 = vmatpush1.msra.mxu0 %v470
        %1135 = vmatprep.subr.mxu0 %v487
        %1136 = vmatpush1.msra.mxu0 %v486
        %1137 = vmatprep.subr.mxu0 %v503
        %1138 = vmatpush1.msra.mxu0 %v502
        %1139 = vmatprep.subr.mxu0 %v519
        %1140 = vmatpush1.msra.mxu0 %v518
        %1141 = vmatprep.subr.mxu0 %v535
        %1142 = vmatpush1.msra.mxu0 %v534
        %1143 = vmatprep.subr.mxu0 %v551
        %1144 = vmatpush1.msra.mxu0 %v550
        %1145 = vmatprep.subr.mxu0 %v567
        %1146 = vmatpush1.msra.mxu0 %v566
        %1147 = vmatprep.subr.mxu0 %v583
        %1148 = vmatpush1.msra.mxu0 %v582
        %1149 = vmatprep.subr.mxu0 %v599
        %1150 = vmatpush1.msra.mxu0 %v598
        %1151 = vmatprep.subr.mxu0 %v615
        %1152 = vmatpush1.msra.mxu0 %v614
        %1153 = vmatprep.subr.mxu0 %v631
        %1154 = vmatpush1.msra.mxu0 %v630
        %1155 = vmatprep.subr.mxu0 %v647
        %1156 = vmatpush1.msra.mxu0 %v646
        %1157 = vmatprep.subr.mxu0 %v663
        %1158 = vmatpush1.msra.mxu0 %v662
        %1159 = vmatprep.subr.mxu0 %v679
        %1160 = vmatpush1.msra.mxu0 %v678
        %1161 = vmatprep.subr.mxu0 %v695
        %1162 = vmatpush1.msra.mxu0 %v694
        %1163 = vmatprep.subr.mxu0 %v711
        %1164 = vmatpush1.msra.mxu0 %v710
        %1165 = vmatprep.subr.mxu0 %v727
        %1166 = vmatpush1.msra.mxu0 %v726
        %1167 = vmatprep.subr.mxu0 %v743
        %1168 = vmatpush1.msra.mxu0 %v742
        %1169 = vmatprep.subr.mxu0 %v759
        %1170 = vmatpush1.msra.mxu0 %v758
        %1171 = vmatprep.subr.mxu0 %v775
        %1172 = vmatpush1.msra.mxu0 %v774
        %1173 = vmatprep.subr.mxu0 %v791
        %1174 = vmatpush1.msra.mxu0 %v790
        %1175 = vmatprep.subr.mxu0 %v807
        %1176 = vmatpush1.msra.mxu0 %v806
        %1177 = vmatprep.mubr.f32.mxu0 %v303
        %1178 = vmatmul.mubr.f32.gmra.mrb[0].mxu0 %v302
        %v1179 = vpop.f32.mrb[0].mxu0
        %v1180 = vadd.f32 %v847, %v1179
        %v1181 = vpop.f32.mrb[0].mxu0
        %v1182 = vadd.f32 %v851, %v1181
        %1183 = vdwg.mxu0
        %1184 = vmatprep.subr.mxu0 %v313
        %1185 = vmatpush1.msra.mxu0 %v312
        %1186 = vmatprep.subr.mxu0 %v329
        %1187 = vmatpush1.msra.mxu0 %v328
        %1188 = vmatprep.subr.mxu0 %v345
        %1189 = vmatpush1.msra.mxu0 %v344
        %1190 = vmatprep.subr.mxu0 %v361
        %1191 = vmatpush1.msra.mxu0 %v360
        %1192 = vmatprep.subr.mxu0 %v377
        %1193 = vmatpush1.msra.mxu0 %v376
        %1194 = vmatprep.subr.mxu0 %v393
        %1195 = vmatpush1.msra.mxu0 %v392
        %1196 = vmatprep.subr.mxu0 %v409
        %1197 = vmatpush1.msra.mxu0 %v408
        %1198 = vmatprep.subr.mxu0 %v425
        %1199 = vmatpush1.msra.mxu0 %v424
        %1200 = vmatprep.subr.mxu0 %v441
        %1201 = vmatpush1.msra.mxu0 %v440
        %1202 = vmatprep.subr.mxu0 %v457
        %1203 = vmatpush1.msra.mxu0 %v456
        %1204 = vmatprep.subr.mxu0 %v473
        %1205 = vmatpush1.msra.mxu0 %v472
        %1206 = vmatprep.subr.mxu0 %v489
        %1207 = vmatpush1.msra.mxu0 %v488
        %1208 = vmatprep.subr.mxu0 %v505
        %1209 = vmatpush1.msra.mxu0 %v504
        %1210 = vmatprep.subr.mxu0 %v521
        %1211 = vmatpush1.msra.mxu0 %v520
        %1212 = vmatprep.subr.mxu0 %v537
        %1213 = vmatpush1.msra.mxu0 %v536
        %1214 = vmatprep.subr.mxu0 %v553
        %1215 = vmatpush1.msra.mxu0 %v552
        %1216 = vmatprep.subr.mxu0 %v569
        %1217 = vmatpush1.msra.mxu0 %v568
        %1218 = vmatprep.subr.mxu0 %v585
        %1219 = vmatpush1.msra.mxu0 %v584
        %1220 = vmatprep.subr.mxu0 %v601
        %1221 = vmatpush1.msra.mxu0 %v600
        %1222 = vmatprep.subr.mxu0 %v617
        %1223 = vmatpush1.msra.mxu0 %v616
        %1224 = vmatprep.subr.mxu0 %v633
        %1225 = vmatpush1.msra.mxu0 %v632
        %1226 = vmatprep.subr.mxu0 %v649
        %1227 = vmatpush1.msra.mxu0 %v648
        %1228 = vmatprep.subr.mxu0 %v665
        %1229 = vmatpush1.msra.mxu0 %v664
        %1230 = vmatprep.subr.mxu0 %v681
        %1231 = vmatpush1.msra.mxu0 %v680
        %1232 = vmatprep.subr.mxu0 %v697
        %1233 = vmatpush1.msra.mxu0 %v696
        %1234 = vmatprep.subr.mxu0 %v713
        %1235 = vmatpush1.msra.mxu0 %v712
        %1236 = vmatprep.subr.mxu0 %v729
        %1237 = vmatpush1.msra.mxu0 %v728
        %1238 = vmatprep.subr.mxu0 %v745
        %1239 = vmatpush1.msra.mxu0 %v744
        %1240 = vmatprep.subr.mxu0 %v761
        %1241 = vmatpush1.msra.mxu0 %v760
        %1242 = vmatprep.subr.mxu0 %v777
        %1243 = vmatpush1.msra.mxu0 %v776
        %1244 = vmatprep.subr.mxu0 %v793
        %1245 = vmatpush1.msra.mxu0 %v792
        %1246 = vmatprep.subr.mxu0 %v809
        %1247 = vmatpush1.msra.mxu0 %v808
        %1248 = vmatprep.mubr.f32.mxu0 %v303
        %1249 = vmatmul.mubr.f32.gmra.mrb[0].mxu0 %v302
        %v1250 = vpop.f32.mrb[0].mxu0
        %v1251 = vadd.f32 %v855, %v1250
        %v1252 = vpop.f32.mrb[0].mxu0
        %v1253 = vadd.f32 %v859, %v1252
        %1254 = vdwg.mxu0
        %1255 = vmatprep.subr.mxu0 %v315
        %1256 = vmatpush1.msra.mxu0 %v314
        %1257 = vmatprep.subr.mxu0 %v331
        %1258 = vmatpush1.msra.mxu0 %v330
        %1259 = vmatprep.subr.mxu0 %v347
        %1260 = vmatpush1.msra.mxu0 %v346
        %1261 = vmatprep.subr.mxu0 %v363
        %1262 = vmatpush1.msra.mxu0 %v362
        %1263 = vmatprep.subr.mxu0 %v379
        %1264 = vmatpush1.msra.mxu0 %v378
        %1265 = vmatprep.subr.mxu0 %v395
        %1266 = vmatpush1.msra.mxu0 %v394
        %1267 = vmatprep.subr.mxu0 %v411
        %1268 = vmatpush1.msra.mxu0 %v410
        %1269 = vmatprep.subr.mxu0 %v427
        %1270 = vmatpush1.msra.mxu0 %v426
        %1271 = vmatprep.subr.mxu0 %v443
        %1272 = vmatpush1.msra.mxu0 %v442
        %1273 = vmatprep.subr.mxu0 %v459
        %1274 = vmatpush1.msra.mxu0 %v458
        %1275 = vmatprep.subr.mxu0 %v475
        %1276 = vmatpush1.msra.mxu0 %v474
        %1277 = vmatprep.subr.mxu0 %v491
        %1278 = vmatpush1.msra.mxu0 %v490
        %1279 = vmatprep.subr.mxu0 %v507
        %1280 = vmatpush1.msra.mxu0 %v506
        %1281 = vmatprep.subr.mxu0 %v523
        %1282 = vmatpush1.msra.mxu0 %v522
        %1283 = vmatprep.subr.mxu0 %v539
        %1284 = vmatpush1.msra.mxu0 %v538
        %1285 = vmatprep.subr.mxu0 %v555
        %1286 = vmatpush1.msra.mxu0 %v554
        %1287 = vmatprep.subr.mxu0 %v571
        %1288 = vmatpush1.msra.mxu0 %v570
        %1289 = vmatprep.subr.mxu0 %v587
        %1290 = vmatpush1.msra.mxu0 %v586
        %1291 = vmatprep.subr.mxu0 %v603
        %1292 = vmatpush1.msra.mxu0 %v602
        %1293 = vmatprep.subr.mxu0 %v619
        %1294 = vmatpush1.msra.mxu0 %v618
        %1295 = vmatprep.subr.mxu0 %v635
        %1296 = vmatpush1.msra.mxu0 %v634
        %1297 = vmatprep.subr.mxu0 %v651
        %1298 = vmatpush1.msra.mxu0 %v650
        %1299 = vmatprep.subr.mxu0 %v667
        %1300 = vmatpush1.msra.mxu0 %v666
        %1301 = vmatprep.subr.mxu0 %v683
        %1302 = vmatpush1.msra.mxu0 %v682
        %1303 = vmatprep.subr.mxu0 %v699
        %1304 = vmatpush1.msra.mxu0 %v698
        %1305 = vmatprep.subr.mxu0 %v715
        %1306 = vmatpush1.msra.mxu0 %v714
        %1307 = vmatprep.subr.mxu0 %v731
        %1308 = vmatpush1.msra.mxu0 %v730
        %1309 = vmatprep.subr.mxu0 %v747
        %1310 = vmatpush1.msra.mxu0 %v746
        %1311 = vmatprep.subr.mxu0 %v763
        %1312 = vmatpush1.msra.mxu0 %v762
        %1313 = vmatprep.subr.mxu0 %v779
        %1314 = vmatpush1.msra.mxu0 %v778
        %1315 = vmatprep.subr.mxu0 %v795
        %1316 = vmatpush1.msra.mxu0 %v794
        %1317 = vmatprep.subr.mxu0 %v811
        %1318 = vmatpush1.msra.mxu0 %v810
        %1319 = vmatprep.mubr.f32.mxu0 %v303
        %1320 = vmatmul.mubr.f32.gmra.mrb[0].mxu0 %v302
        %v1321 = vpop.f32.mrb[0].mxu0
        %v1322 = vadd.f32 %v863, %v1321
        %v1323 = vpop.f32.mrb[0].mxu0
        %v1324 = vadd.f32 %v867, %v1323
        %1325 = vdwg.mxu0
        %1326 = vmatprep.subr.mxu0 %v317
        %1327 = vmatpush1.msra.mxu0 %v316
        %1328 = vmatprep.subr.mxu0 %v333
        %1329 = vmatpush1.msra.mxu0 %v332
        %1330 = vmatprep.subr.mxu0 %v349
        %1331 = vmatpush1.msra.mxu0 %v348
        %1332 = vmatprep.subr.mxu0 %v365
        %1333 = vmatpush1.msra.mxu0 %v364
        %1334 = vmatprep.subr.mxu0 %v381
        %1335 = vmatpush1.msra.mxu0 %v380
        %1336 = vmatprep.subr.mxu0 %v397
        %1337 = vmatpush1.msra.mxu0 %v396
        %1338 = vmatprep.subr.mxu0 %v413
        %1339 = vmatpush1.msra.mxu0 %v412
        %1340 = vmatprep.subr.mxu0 %v429
        %1341 = vmatpush1.msra.mxu0 %v428
        %1342 = vmatprep.subr.mxu0 %v445
        %1343 = vmatpush1.msra.mxu0 %v444
        %1344 = vmatprep.subr.mxu0 %v461
        %1345 = vmatpush1.msra.mxu0 %v460
        %1346 = vmatprep.subr.mxu0 %v477
        %1347 = vmatpush1.msra.mxu0 %v476
        %1348 = vmatprep.subr.mxu0 %v493
        %1349 = vmatpush1.msra.mxu0 %v492
        %1350 = vmatprep.subr.mxu0 %v509
        %1351 = vmatpush1.msra.mxu0 %v508
        %1352 = vmatprep.subr.mxu0 %v525
        %1353 = vmatpush1.msra.mxu0 %v524
        %1354 = vmatprep.subr.mxu0 %v541
        %1355 = vmatpush1.msra.mxu0 %v540
        %1356 = vmatprep.subr.mxu0 %v557
        %1357 = vmatpush1.msra.mxu0 %v556
        %1358 = vmatprep.subr.mxu0 %v573
        %1359 = vmatpush1.msra.mxu0 %v572
        %1360 = vmatprep.subr.mxu0 %v589
        %1361 = vmatpush1.msra.mxu0 %v588
        %1362 = vmatprep.subr.mxu0 %v605
        %1363 = vmatpush1.msra.mxu0 %v604
        %1364 = vmatprep.subr.mxu0 %v621
        %1365 = vmatpush1.msra.mxu0 %v620
        %1366 = vmatprep.subr.mxu0 %v637
        %1367 = vmatpush1.msra.mxu0 %v636
        %1368 = vmatprep.subr.mxu0 %v653
        %1369 = vmatpush1.msra.mxu0 %v652
        %1370 = vmatprep.subr.mxu0 %v669
        %1371 = vmatpush1.msra.mxu0 %v668
        %1372 = vmatprep.subr.mxu0 %v685
        %1373 = vmatpush1.msra.mxu0 %v684
        %1374 = vmatprep.subr.mxu0 %v701
        %1375 = vmatpush1.msra.mxu0 %v700
        %1376 = vmatprep.subr.mxu0 %v717
        %1377 = vmatpush1.msra.mxu0 %v716
        %1378 = vmatprep.subr.mxu0 %v733
        %1379 = vmatpush1.msra.mxu0 %v732
        %1380 = vmatprep.subr.mxu0 %v749
        %1381 = vmatpush1.msra.mxu0 %v748
        %1382 = vmatprep.subr.mxu0 %v765
        %1383 = vmatpush1.msra.mxu0 %v764
        %1384 = vmatprep.subr.mxu0 %v781
        %1385 = vmatpush1.msra.mxu0 %v780
        %1386 = vmatprep.subr.mxu0 %v797
        %1387 = vmatpush1.msra.mxu0 %v796
        %1388 = vmatprep.subr.mxu0 %v813
        %1389 = vmatpush1.msra.mxu0 %v812
        %1390 = vmatprep.mubr.f32.mxu0 %v303
        %1391 = vmatmul.mubr.f32.gmra.mrb[0].mxu0 %v302
        %v1392 = vpop.f32.mrb[0].mxu0
        %v1393 = vadd.f32 %v871, %v1392
        %v1394 = vpop.f32.mrb[0].mxu0
        %v1395 = vadd.f32 %v875, %v1394
        %1396 = vdwg.mxu0
        %1397 = vmatprep.subr.mxu0 %v319
        %1398 = vmatpush1.msra.mxu0 %v318
        %1399 = vmatprep.subr.mxu0 %v335
        %1400 = vmatpush1.msra.mxu0 %v334
        %1401 = vmatprep.subr.mxu0 %v351
        %1402 = vmatpush1.msra.mxu0 %v350
        %1403 = vmatprep.subr.mxu0 %v367
        %1404 = vmatpush1.msra.mxu0 %v366
        %1405 = vmatprep.subr.mxu0 %v383
        %1406 = vmatpush1.msra.mxu0 %v382
        %1407 = vmatprep.subr.mxu0 %v399
        %1408 = vmatpush1.msra.mxu0 %v398
        %1409 = vmatprep.subr.mxu0 %v415
        %1410 = vmatpush1.msra.mxu0 %v414
        %1411 = vmatprep.subr.mxu0 %v431
        %1412 = vmatpush1.msra.mxu0 %v430
        %1413 = vmatprep.subr.mxu0 %v447
        %1414 = vmatpush1.msra.mxu0 %v446
        %1415 = vmatprep.subr.mxu0 %v463
        %1416 = vmatpush1.msra.mxu0 %v462
        %1417 = vmatprep.subr.mxu0 %v479
        %1418 = vmatpush1.msra.mxu0 %v478
        %1419 = vmatprep.subr.mxu0 %v495
        %1420 = vmatpush1.msra.mxu0 %v494
        %1421 = vmatprep.subr.mxu0 %v511
        %1422 = vmatpush1.msra.mxu0 %v510
        %1423 = vmatprep.subr.mxu0 %v527
        %1424 = vmatpush1.msra.mxu0 %v526
        %1425 = vmatprep.subr.mxu0 %v543
        %1426 = vmatpush1.msra.mxu0 %v542
        %1427 = vmatprep.subr.mxu0 %v559
        %1428 = vmatpush1.msra.mxu0 %v558
        %1429 = vmatprep.subr.mxu0 %v575
        %1430 = vmatpush1.msra.mxu0 %v574
        %1431 = vmatprep.subr.mxu0 %v591
        %1432 = vmatpush1.msra.mxu0 %v590
        %1433 = vmatprep.subr.mxu0 %v607
        %1434 = vmatpush1.msra.mxu0 %v606
        %1435 = vmatprep.subr.mxu0 %v623
        %1436 = vmatpush1.msra.mxu0 %v622
        %1437 = vmatprep.subr.mxu0 %v639
        %1438 = vmatpush1.msra.mxu0 %v638
        %1439 = vmatprep.subr.mxu0 %v655
        %1440 = vmatpush1.msra.mxu0 %v654
        %1441 = vmatprep.subr.mxu0 %v671
        %1442 = vmatpush1.msra.mxu0 %v670
        %1443 = vmatprep.subr.mxu0 %v687
        %1444 = vmatpush1.msra.mxu0 %v686
        %1445 = vmatprep.subr.mxu0 %v703
        %1446 = vmatpush1.msra.mxu0 %v702
        %1447 = vmatprep.subr.mxu0 %v719
        %1448 = vmatpush1.msra.mxu0 %v718
        %1449 = vmatprep.subr.mxu0 %v735
        %1450 = vmatpush1.msra.mxu0 %v734
        %1451 = vmatprep.subr.mxu0 %v751
        %1452 = vmatpush1.msra.mxu0 %v750
        %1453 = vmatprep.subr.mxu0 %v767
        %1454 = vmatpush1.msra.mxu0 %v766
        %1455 = vmatprep.subr.mxu0 %v783
        %1456 = vmatpush1.msra.mxu0 %v782
        %1457 = vmatprep.subr.mxu0 %v799
        %1458 = vmatpush1.msra.mxu0 %v798
        %1459 = vmatprep.subr.mxu0 %v815
        %1460 = vmatpush1.msra.mxu0 %v814
        %1461 = vmatprep.mubr.f32.mxu0 %v303
        %1462 = vmatmul.mubr.f32.gmra.mrb[0].mxu0 %v302
        %v1463 = vpop.f32.mrb[0].mxu0
        %v1464 = vadd.f32 %v879, %v1463
        %v1465 = vpop.f32.mrb[0].mxu0
        %v1466 = vadd.f32 %v883, %v1465
        %1467 = vdwg.mxu0
        %v1484 = vcombine.low %v967, %v969
        %v1485 = vcombine.low %v1038, %v1040
        %v1486 = vcombine.low %v1109, %v1111
        %v1487 = vcombine.low %v1180, %v1182
        %v1488 = vcombine.low %v1251, %v1253
        %v1489 = vcombine.low %v1322, %v1324
        %v1490 = vcombine.low %v1393, %v1395
        %v1491 = vcombine.low %v1464, %v1466
        %1500 = vst [vmem:[%s237] sm:$0xff] %v1484
        %1501 = vst [vmem:[%s237 + $0x8] sm:$0xff] %v1485
        %1502 = vst [vmem:[%s237 + $0x10] sm:$0xff] %v1486
        %1503 = vst [vmem:[%s237 + $0x18] sm:$0xff] %v1487
        %1504 = vst [vmem:[%s237 + $0x20] sm:$0xff] %v1488
        %1505 = vst [vmem:[%s237 + $0x28] sm:$0xff] %v1489
        %1506 = vst [vmem:[%s237 + $0x30] sm:$0xff] %v1490
        %1507 = vst [vmem:[%s237 + $0x38] sm:$0xff] %v1491
        %p1508 = scmp.lt.s32.totalorder %s17, 1
        %s1509 = scalar_select %p1508, %s17, 1
        %s1510 = smul.addr %s1509, 16
        %s1511 = smul.addr %s1510, 4
        %s1512 = scalar_lea.vmem %s4, %s1511
        // Predicated region
        $region49: #{forward.1} parent=35 // pred_check
          %p1513 = pneg %p124
        $region50: #{forward.1} parent=35 // pred_check_branch
          %1515 = sbr.rel (%p1513) target = $region52
        $region51: #{forward.1} parent=35 // pred_region
          _
        $region52: #{forward.1} parent=35 // pred_fallthru
          _
      $region36: #{forward.1} parent=5 // pred_fallthru
        _
      %p1516 = scmp.le.s32.totalorder 2, %s12
      // Predicated region
      $region53: #{forward.1} parent=5 // pred_check
        %p1517 = pneg %p1516
      $region54: #{forward.1} parent=5 // pred_check_branch
        %1519 = sbr.rel (%p1517) target = $region56
      $region55: #{forward.1} parent=5 // pred_region
        %s1520 = ssub.s32 %s12, 2
        // Predicated region
        $region57: #{forward.1} parent=55 // pred_check
          %p1521 = pneg %p130
        $region58: #{forward.1} parent=55 // pred_check_branch
          %1523 = sbr.rel (%p1521) target = $region60
        $region59: #{forward.1} parent=55 // pred_region
          %p1524 = scmp.lt.s32.totalorder %s18, 1
          %s1525 = scalar_select %p1524, %s18, 1
          %s1526 = smul.addr %s1525, 16
          %s1527 = smul.addr %s1526, 4
          %s1528 = scalar_lea.vmem %s4, %s1527
        $region60: #{forward.1} parent=55 // pred_fallthru
          _
      $region56: #{forward.1} parent=5 // pred_fallthru
        _
    $region6: #{forward.1} parent=1 // loop_footer
      %s16 = sadd.s32 1, %s12
    $region7: #{forward.1} parent=1 // loop_footer_branch
      %11 = sbr.rel target = $region3
    $region8: #{forward.1} parent=1 // loop_exit
      _
    %1529 = vsyncpa [#allocation3], 1
    %s1530 = scalar_lea.sflag [#allocation3], 1
    %1531 = vsyncpa %s1530, 1
    %1532 = vsyncpa [#allocation5], 1

</llo_original>
